<compile_context>
chip_gen: v5e
topology: v5e:2x2
jax: 0.10.0
libtpu: 0.0.40
codegen_flags: <defaults>
</compile_context>

<pallas_src>
import math

import jax
import jax.numpy as jnp
from jax import lax
from jax.experimental import pallas as pl
from jax.experimental.pallas import tpu as pltpu  # noqa: F401  (kept for parity)

# ---------------- model hyper-params (small, consistent with the module) -----
CHANNEL = 4          # channel
WH = 8               # width_height
SIZE = 2             # size (patch side)
H_GRID = WH // SIZE  # h = w = 4
D_MODEL = CHANNEL * H_GRID * H_GRID   # 4*4*4 = 64
NHEAD = 8
HEAD_DIM = D_MODEL // NHEAD           # 8
DIM_FF = 64
NUM_LAYERS = 2
SEQ = SIZE * SIZE                     # 4 tokens per image

assert D_MODEL == NHEAD * HEAD_DIM
assert DIM_FF == D_MODEL              # lets b1 share the (rows, D) vector slab
for _v in (SIZE, SEQ, NHEAD, HEAD_DIM):
    assert _v & (_v - 1) == 0         # pow2 -> iota masks use shifts, not int div


def _fdiv(x, n):
    """x // n for power-of-two n (vector-safe: shift, no integer division)."""
    return x >> (n.bit_length() - 1)


def _fmod(x, n):
    """x % n for power-of-two n."""
    return x & (n - 1)


# ------------------------------- fused Pallas kernel -------------------------
def fused_compress_kernel(ych_ref, wqkv_ref, wmlp_ref, posb_ref, vec_ref, o_ref):
    """Whole CompressModel forward on one (T, D) token slab, VMEM-resident.

    ych_ref : (T, D)                change(x) tokens, row = b*SEQ + s (b-major)
    wqkv_ref: (NUM_LAYERS*D, 3D)    per-layer [Wq | Wk | Wv]
    wmlp_ref: (NUM_LAYERS*3D, D)    per-layer [Wo ; W1 ; W2] row blocks
    posb_ref: (NUM_LAYERS*SEQ, 3D)  per-layer [pos@Wq+bq | pos@Wk+bk | bv]
    vec_ref : (NUM_LAYERS*7+2, D)   per-layer [n1_g,n1_b,bo,n2_g,n2_b,b1,b2], final [g,b]
    o_ref   : (T, 2D)               [ sigmoid(y1)*change(x) | y1 ]
    """
    f32 = jnp.float32
    T, D = ych_ref.shape
    B = T // SEQ
    HS = NHEAD * SEQ            # packed score columns per image (= 32)
    C = B * HS                  # total packed score columns     (= 64)
    scale = 1.0 / math.sqrt(HEAD_DIM)

    def iota(shape, dim):
        return lax.broadcasted_iota(jnp.int32, shape, dim)

    # ---- structured constants, built once from iota (hoisted out of layers) --
    # L2pooling (filter_size=5 -> 3x3 hann, stride 1, padding 1 'same',
    # depthwise) on a SIZE x SIZE patch == block-diagonal (T, T) matrix applied
    # to squared tokens.  Separable 1-D weights: 0.5 (same), 0.25 (|d|==1).
    r = iota((T, T), 0)
    c = iota((T, T), 1)
    ir = _fdiv(_fmod(r, SEQ), SIZE)
    jr = _fmod(r, SIZE)
    ic = _fdiv(_fmod(c, SEQ), SIZE)
    jc = _fmod(c, SIZE)
    di = jnp.abs((ir - ic).astype(f32))
    dj = jnp.abs((jr - jc).astype(f32))
    wi = jnp.where(di < 0.5, 0.5, jnp.where(di < 1.5, 0.25, 0.0))
    wj = jnp.where(dj < 0.5, 0.5, jnp.where(dj < 1.5, 0.25, 0.0))
    pool_m = jnp.where(_fdiv(r, SEQ) == _fdiv(c, SEQ), wi * wj, 0.0).astype(f32)

    # Head-structure mask for the packed K / V matrices:
    #   packed row c = b*HS + h*SEQ + j   holds  k[b*SEQ + j, :] masked to head h.
    kc = iota((C, D), 0)
    kd = iota((C, D), 1)
    head_mask = (_fmod(_fdiv(kc, SEQ), NHEAD) == _fdiv(kd, HEAD_DIM)).astype(f32)

    # Batch-validity mask on the (T, C) score slab (queries attend only inside
    # their own image) and the (C, C) block-diag-ones segment-sum matrix.
    sr = iota((T, C), 0)
    sc = iota((T, C), 1)
    batch_valid = (_fdiv(sr, SEQ) == _fdiv(sc, HS)).astype(f32)
    score_bias = (batch_valid - 1.0) * 1e9      # 0 on valid, -1e9 cross-image
    den_fix = 1.0 - batch_valid                 # keeps masked groups' denom > 0
    g1 = iota((C, C), 0)
    g2 = iota((C, C), 1)
    group_sum = (_fdiv(g1, SEQ) == _fdiv(g2, SEQ)).astype(f32)

    def layernorm(x, g, b):
        mean = jnp.mean(x, axis=-1, keepdims=True)
        xc = x - mean
        var = jnp.mean(xc * xc, axis=-1, keepdims=True)
        return xc * lax.rsqrt(var + 1e-5) * g + b

    def head_expand(x):
        # (T, D) -> (C, D): row b*HS + h*SEQ + j  <-  x[b*SEQ + j, :]
        blocks = []
        for b in range(B):
            xb = x[b * SEQ:(b + 1) * SEQ, :]
            blocks.append(jnp.concatenate([xb] * NHEAD, axis=0))
        return jnp.concatenate(blocks, axis=0)

    ych = ych_ref[...].astype(f32)                                   # (T, D)

    # ---- L2pooling: one small matmul over squared tokens --------------------
    src = jnp.sqrt(jnp.dot(pool_m, ych * ych,
                           preferred_element_type=f32) + 1e-12)

    for l in range(NUM_LAYERS):
        vb = l * 7
        n1_g = vec_ref[vb + 0:vb + 1, :]
        n1_b = vec_ref[vb + 1:vb + 2, :]
        bo = vec_ref[vb + 2:vb + 3, :]
        n2_g = vec_ref[vb + 3:vb + 4, :]
        n2_b = vec_ref[vb + 4:vb + 5, :]
        b1 = vec_ref[vb + 5:vb + 6, :]
        b2 = vec_ref[vb + 6:vb + 7, :]

        wqkv = wqkv_ref[l * D:(l + 1) * D, :]                # (D, 3D)
        mb = l * 3 * D
        wo = wmlp_ref[mb + 0 * D:mb + 1 * D, :]              # (D, D)
        w1 = wmlp_ref[mb + 1 * D:mb + 2 * D, :]              # (D, FF)
        w2 = wmlp_ref[mb + 2 * D:mb + 3 * D, :]              # (FF, D)

        posb = posb_ref[l * SEQ:(l + 1) * SEQ, :]            # (SEQ, 3D)
        posb_t = jnp.concatenate([posb] * B, axis=0)         # (T, 3D)

        # ---- pre-norm multi-head self-attention --------------------------
        src2 = layernorm(src, n1_g, n1_b)
        # fused Q|K|V projection; pos (and biases) folded in via posb_t
        qkv = jnp.dot(src2, wqkv, preferred_element_type=f32) + posb_t
        q = qkv[:, 0:D]
        k = qkv[:, D:2 * D]
        v = qkv[:, 2 * D:3 * D]

        k_s = head_expand(k) * head_mask                     # (C, D)
        v_s = head_expand(v) * head_mask                     # (C, D)

        # packed scores for all (image, head) blocks at once: (T, C)
        s = lax.dot_general(q, k_s, (((1,), (1,)), ((), ())),
                            preferred_element_type=f32) * scale + score_bias
        p = jnp.exp(s - jnp.max(s, axis=-1, keepdims=True))  # single exp
        den = jnp.dot(p, group_sum, preferred_element_type=f32) + den_fix
        # TODO(synk): use exact division for bit-parity with a PyTorch reference.
        p = p * pl.reciprocal(den, approx=True)
        attn = jnp.dot(p, v_s, preferred_element_type=f32)   # (T, D), heads concat

        src = src + jnp.dot(attn, wo, preferred_element_type=f32) + bo

        # ---- pre-norm feed-forward (ReLU) ---------------------------------
        src2 = layernorm(src, n2_g, n2_b)
        ff = jnp.maximum(
            jnp.dot(src2, w1, preferred_element_type=f32) + b1, 0.0)
        src = src + jnp.dot(ff, w2, preferred_element_type=f32) + b2

    # ---- final encoder norm + sigmoid gate epilogue ------------------------
    ng = vec_ref[NUM_LAYERS * 7 + 0:NUM_LAYERS * 7 + 1, :]
    nb = vec_ref[NUM_LAYERS * 7 + 1:NUM_LAYERS * 7 + 2, :]
    out_tok = layernorm(src, ng, nb)                 # y1 in token layout
    gate_tok = jax.nn.sigmoid(out_tok) * ych         # = sigmoid(rechange(y1)) * x
    # single unmasked lane-dense (T, 128) store
    o_ref[...] = jnp.concatenate([gate_tok, out_tok], axis=-1).astype(o_ref.dtype)


# ----------------------------- layout plumbing (XLA) --------------------------
def change(x, size):
    # einops: 'b c (h p1) (w p2) -> b (c h w) p1 p2'
    B, C, H, W = x.shape
    h, w = H // size, W // size
    x = x.reshape(B, C, h, size, w, size)
    x = jnp.transpose(x, (0, 1, 2, 4, 3, 5))
    return x.reshape(B, C * h * w, size, size)


def rechange(y, channel, h, w, size):
    # einops: 'b (c h w) p1 p2 -> b c (h p1) (w p2)'
    B = y.shape[0]
    y = y.reshape(B, channel, h, w, size, size)
    y = jnp.transpose(y, (0, 1, 2, 4, 3, 5))
    return y.reshape(B, channel, h * size, w * size)


def compress_model_forward(x, params):
    B, C, HH, WW = x.shape
    h, w = HH // SIZE, WW // SIZE
    D = C * h * w                      # == D_MODEL
    T = B * SEQ

    # token layout: row = b*SEQ + s (b-major), lanes = D features
    ych = change(x, SIZE)                                         # (B, D, S, S)
    ych_tok = jnp.transpose(ych.reshape(B, D, SEQ), (0, 2, 1)).reshape(T, D)

    # Single fused pallas_call, no grid: every operand is one VMEM-resident
    # block (~0.2 MiB total); 5 input DMAs (1 activation + 4 packed param slabs).
    o = pl.pallas_call(
        fused_compress_kernel,
        out_shape=jax.ShapeDtypeStruct((T, 2 * D), jnp.float32),
    )(ych_tok, params['wqkv'], params['wmlp'], params['posb'], params['vec'])

    gate_tok = o[:, :D]
    out_tok = o[:, D:]
    y1 = jnp.transpose(out_tok.reshape(B, SEQ, D),
                       (0, 2, 1)).reshape(B, D, SIZE, SIZE)
    gated_ch = jnp.transpose(gate_tok.reshape(B, SEQ, D),
                             (0, 2, 1)).reshape(B, D, SIZE, SIZE)
    gated = rechange(gated_ch, C, h, w, SIZE)
    return gated.astype(x.dtype), y1.astype(x.dtype)


# --------------------------------- params -------------------------------------
def init_params(key):
    """Random weights, pre-packed into 4 DMA-friendly slabs."""
    keys = jax.random.split(key, 1 + NUM_LAYERS)
    # learned pos embedding (nn.Embedding(d_model, size*size)), expressed as an
    # equivalent (SEQ, D_MODEL) table in token layout.
    pos = 0.1 * jax.random.normal(keys[0], (SEQ, D_MODEL), jnp.float32)
    s = 0.05
    D = D_MODEL

    wqkv_blocks, wmlp_blocks, posb_blocks, vec_rows = [], [], [], []
    for l in range(NUM_LAYERS):
        ks = jax.random.split(keys[1 + l], 6)
        wq = s * jax.random.normal(ks[0], (D, D), jnp.float32)
        wk = s * jax.random.normal(ks[1], (D, D), jnp.float32)
        wv = s * jax.random.normal(ks[2], (D, D), jnp.float32)
        wo = s * jax.random.normal(ks[3], (D, D), jnp.float32)
        w1 = s * jax.random.normal(ks[4], (D, DIM_FF), jnp.float32)
        w2 = s * jax.random.normal(ks[5], (DIM_FF, D), jnp.float32)
        bq = jnp.zeros((D,), jnp.float32)
        bk = jnp.zeros((D,), jnp.float32)
        bv = jnp.zeros((D,), jnp.float32)
        bo = jnp.zeros((D,), jnp.float32)
        b1 = jnp.zeros((DIM_FF,), jnp.float32)
        b2 = jnp.zeros((D,), jnp.float32)
        n1_g = jnp.ones((D,), jnp.float32)
        n1_b = jnp.zeros((D,), jnp.float32)
        n2_g = jnp.ones((D,), jnp.float32)
        n2_b = jnp.zeros((D,), jnp.float32)

        wqkv_blocks.append(jnp.concatenate([wq, wk, wv], axis=1))   # (D, 3D)
        wmlp_blocks.append(jnp.concatenate([wo, w1, w2], axis=0))   # (3D, D)
        # pos folded into the q/k projection by linearity: per-token bias slab
        posb_blocks.append(jnp.concatenate(
            [pos @ wq + bq, pos @ wk + bk,
             jnp.broadcast_to(bv, (SEQ, D))], axis=1))              # (SEQ, 3D)
        vec_rows += [n1_g, n1_b, bo, n2_g, n2_b, b1, b2]

    vec_rows += [jnp.ones((D,), jnp.float32),      # final encoder-norm gamma
                 jnp.zeros((D,), jnp.float32)]     # final encoder-norm beta
    return {
        'wqkv': jnp.concatenate(wqkv_blocks, axis=0),   # (L*D,   3D) = (128, 192)
        'wmlp': jnp.concatenate(wmlp_blocks, axis=0),   # (L*3D,  D ) = (384,  64)
        'posb': jnp.concatenate(posb_blocks, axis=0),   # (L*SEQ, 3D) = (  8, 192)
        'vec': jnp.stack(vec_rows, axis=0),             # (7L+2,  D ) = ( 16,  64)
    }


if __name__ == "__main__":
    key = jax.random.PRNGKey(0)
    kx, kp = jax.random.split(key)
    x = jax.random.normal(kx, (2, CHANNEL, WH, WH), jnp.float32)
    params = init_params(kp)

    fwd = jax.jit(compress_model_forward)
    gated, y1 = fwd(x, params)
    jax.block_until_ready((gated, y1))

    assert gated.shape == (2, CHANNEL, WH, WH), gated.shape
    assert y1.shape == (2, D_MODEL, SIZE, SIZE), y1.shape
    assert bool(jnp.all(jnp.isfinite(gated))) and bool(jnp.all(jnp.isfinite(y1)))
    print("KERNEL_OK")
</pallas_src>

<mosaic_0001>
module attributes {stable_mosaic.version = 11 : i64} {
  func.func @fused_compress_kernel(%arg0: memref<8x64xf32, #tpu.memory_space<vmem>>, %arg1: memref<128x192xf32, #tpu.memory_space<vmem>>, %arg2: memref<384x64xf32, #tpu.memory_space<vmem>>, %arg3: memref<8x192xf32, #tpu.memory_space<vmem>>, %arg4: memref<16x64xf32, #tpu.memory_space<vmem>>, %arg5: memref<8x128xf32, #tpu.memory_space<vmem>>) attributes {dimension_semantics = [], scalar_prefetch = 0 : i64, scratch_operands = 0 : i64, tpu.core_type = #tpu.core_type<tc>} {
    %0 = tpu.iota {dimensions = array<i32: 0>} : vector<8x8xi32>
    %1 = tpu.iota {dimensions = array<i32: 1>} : vector<8x8xi32>
    %c3_i32 = arith.constant 3 : i32
    %2 = vector.broadcast %c3_i32 : i32 to vector<8x8xi32>
    %3 = arith.andi %0, %2 : vector<8x8xi32>
    %c1_i32 = arith.constant 1 : i32
    %4 = vector.broadcast %c1_i32 : i32 to vector<8x8xi32>
    %5 = arith.shrsi %3, %4 : vector<8x8xi32>
    %c1_i32_0 = arith.constant 1 : i32
    %6 = vector.broadcast %c1_i32_0 : i32 to vector<8x8xi32>
    %7 = arith.andi %0, %6 : vector<8x8xi32>
    %c3_i32_1 = arith.constant 3 : i32
    %8 = vector.broadcast %c3_i32_1 : i32 to vector<8x8xi32>
    %9 = arith.andi %1, %8 : vector<8x8xi32>
    %c1_i32_2 = arith.constant 1 : i32
    %10 = vector.broadcast %c1_i32_2 : i32 to vector<8x8xi32>
    %11 = arith.shrsi %9, %10 : vector<8x8xi32>
    %c1_i32_3 = arith.constant 1 : i32
    %12 = vector.broadcast %c1_i32_3 : i32 to vector<8x8xi32>
    %13 = arith.andi %1, %12 : vector<8x8xi32>
    %14 = arith.subi %5, %11 : vector<8x8xi32>
    %15 = arith.sitofp %14 : vector<8x8xi32> to vector<8x8xf32>
    %16 = math.absf %15 : vector<8x8xf32>
    %17 = arith.subi %7, %13 : vector<8x8xi32>
    %18 = arith.sitofp %17 : vector<8x8xi32> to vector<8x8xf32>
    %19 = math.absf %18 : vector<8x8xf32>
    %cst = arith.constant 5.000000e-01 : f32
    %20 = vector.broadcast %cst : f32 to vector<8x8xf32>
    %21 = arith.cmpf olt, %16, %20 : vector<8x8xf32>
    %cst_4 = arith.constant 1.500000e+00 : f32
    %22 = vector.broadcast %cst_4 : f32 to vector<8x8xf32>
    %23 = arith.cmpf olt, %16, %22 : vector<8x8xf32>
    %cst_5 = arith.constant 2.500000e-01 : f32
    %cst_6 = arith.constant 0.000000e+00 : f32
    %24 = vector.broadcast %cst_5 : f32 to vector<8x8xf32>
    %25 = vector.broadcast %cst_6 : f32 to vector<8x8xf32>
    %26 = arith.select %23, %24, %25 : vector<8x8xi1>, vector<8x8xf32>
    %cst_7 = arith.constant 5.000000e-01 : f32
    %27 = vector.broadcast %cst_7 : f32 to vector<8x8xf32>
    %28 = arith.select %21, %27, %26 : vector<8x8xi1>, vector<8x8xf32>
    %cst_8 = arith.constant 5.000000e-01 : f32
    %29 = vector.broadcast %cst_8 : f32 to vector<8x8xf32>
    %30 = arith.cmpf olt, %19, %29 : vector<8x8xf32>
    %cst_9 = arith.constant 1.500000e+00 : f32
    %31 = vector.broadcast %cst_9 : f32 to vector<8x8xf32>
    %32 = arith.cmpf olt, %19, %31 : vector<8x8xf32>
    %cst_10 = arith.constant 2.500000e-01 : f32
    %cst_11 = arith.constant 0.000000e+00 : f32
    %33 = vector.broadcast %cst_10 : f32 to vector<8x8xf32>
    %34 = vector.broadcast %cst_11 : f32 to vector<8x8xf32>
    %35 = arith.select %32, %33, %34 : vector<8x8xi1>, vector<8x8xf32>
    %cst_12 = arith.constant 5.000000e-01 : f32
    %36 = vector.broadcast %cst_12 : f32 to vector<8x8xf32>
    %37 = arith.select %30, %36, %35 : vector<8x8xi1>, vector<8x8xf32>
    %c2_i32 = arith.constant 2 : i32
    %38 = vector.broadcast %c2_i32 : i32 to vector<8x8xi32>
    %39 = arith.shrsi %0, %38 : vector<8x8xi32>
    %c2_i32_13 = arith.constant 2 : i32
    %40 = vector.broadcast %c2_i32_13 : i32 to vector<8x8xi32>
    %41 = arith.shrsi %1, %40 : vector<8x8xi32>
    %42 = arith.cmpi eq, %39, %41 : vector<8x8xi32>
    %43 = arith.mulf %28, %37 : vector<8x8xf32>
    %cst_14 = arith.constant 0.000000e+00 : f32
    %44 = vector.broadcast %cst_14 : f32 to vector<8x8xf32>
    %45 = arith.select %42, %43, %44 : vector<8x8xi1>, vector<8x8xf32>
    %46 = tpu.iota {dimensions = array<i32: 0>} : vector<64x64xi32>
    %47 = tpu.iota {dimensions = array<i32: 1>} : vector<64x64xi32>
    %c2_i32_15 = arith.constant 2 : i32
    %48 = vector.broadcast %c2_i32_15 : i32 to vector<64x64xi32>
    %49 = arith.shrsi %46, %48 : vector<64x64xi32>
    %c7_i32 = arith.constant 7 : i32
    %50 = vector.broadcast %c7_i32 : i32 to vector<64x64xi32>
    %51 = arith.andi %49, %50 : vector<64x64xi32>
    %c3_i32_16 = arith.constant 3 : i32
    %52 = vector.broadcast %c3_i32_16 : i32 to vector<64x64xi32>
    %53 = arith.shrsi %47, %52 : vector<64x64xi32>
    %54 = arith.cmpi eq, %51, %53 : vector<64x64xi32>
    %55 = arith.extui %54 : vector<64x64xi1> to vector<64x64xi32>
    %56 = arith.sitofp %55 : vector<64x64xi32> to vector<64x64xf32>
    %57 = tpu.iota {dimensions = array<i32: 0>} : vector<8x64xi32>
    %58 = tpu.iota {dimensions = array<i32: 1>} : vector<8x64xi32>
    %c2_i32_17 = arith.constant 2 : i32
    %59 = vector.broadcast %c2_i32_17 : i32 to vector<8x64xi32>
    %60 = arith.shrsi %57, %59 : vector<8x64xi32>
    %c5_i32 = arith.constant 5 : i32
    %61 = vector.broadcast %c5_i32 : i32 to vector<8x64xi32>
    %62 = arith.shrsi %58, %61 : vector<8x64xi32>
    %63 = arith.cmpi eq, %60, %62 : vector<8x64xi32>
    %64 = arith.extui %63 : vector<8x64xi1> to vector<8x64xi32>
    %65 = arith.sitofp %64 : vector<8x64xi32> to vector<8x64xf32>
    %cst_18 = arith.constant 1.000000e+00 : f32
    %66 = vector.broadcast %cst_18 : f32 to vector<8x64xf32>
    %67 = arith.subf %65, %66 : vector<8x64xf32>
    %cst_19 = arith.constant 1.000000e+09 : f32
    %68 = vector.broadcast %cst_19 : f32 to vector<8x64xf32>
    %69 = arith.mulf %67, %68 : vector<8x64xf32>
    %cst_20 = arith.constant 1.000000e+00 : f32
    %70 = vector.broadcast %cst_20 : f32 to vector<8x64xf32>
    %71 = arith.subf %70, %65 : vector<8x64xf32>
    %72 = tpu.iota {dimensions = array<i32: 0>} : vector<64x64xi32>
    %73 = tpu.iota {dimensions = array<i32: 1>} : vector<64x64xi32>
    %c2_i32_21 = arith.constant 2 : i32
    %74 = vector.broadcast %c2_i32_21 : i32 to vector<64x64xi32>
    %75 = arith.shrsi %72, %74 : vector<64x64xi32>
    %c2_i32_22 = arith.constant 2 : i32
    %76 = vector.broadcast %c2_i32_22 : i32 to vector<64x64xi32>
    %77 = arith.shrsi %73, %76 : vector<64x64xi32>
    %78 = arith.cmpi eq, %75, %77 : vector<64x64xi32>
    %79 = arith.extui %78 : vector<64x64xi1> to vector<64x64xi32>
    %80 = arith.sitofp %79 : vector<64x64xi32> to vector<64x64xf32>
    %c0 = arith.constant 0 : index
    %c0_23 = arith.constant 0 : index
    %81 = vector.load %arg0[%c0, %c0_23] : memref<8x64xf32, #tpu.memory_space<vmem>>, vector<8x64xf32>
    %82 = arith.mulf %81, %81 : vector<8x64xf32>
    %cst_24 = arith.constant dense<0.000000e+00> : vector<8x64xf32>
    %83 = tpu.matmul %45, %82, %cst_24 {dimension_numbers = #tpu.dot_dimension_numbers<[1], [0], [0], [1], [0, 0, 1, 1], [], []>} : vector<8x8xf32>, vector<8x64xf32>, vector<8x64xf32> -> vector<8x64xf32>
    %cst_25 = arith.constant 9.99999996E-13 : f32
    %84 = vector.broadcast %cst_25 : f32 to vector<8x64xf32>
    %85 = arith.addf %83, %84 : vector<8x64xf32>
    %86 = math.sqrt %85 : vector<8x64xf32>
    %c0_26 = arith.constant 0 : index
    %c0_27 = arith.constant 0 : index
    %87 = vector.load %arg4[%c0_26, %c0_27] : memref<16x64xf32, #tpu.memory_space<vmem>>, vector<1x64xf32>
    %c1 = arith.constant 1 : index
    %c0_28 = arith.constant 0 : index
    %88 = vector.load %arg4[%c1, %c0_28] : memref<16x64xf32, #tpu.memory_space<vmem>>, vector<1x64xf32>
    %c2 = arith.constant 2 : index
    %c0_29 = arith.constant 0 : index
    %89 = vector.load %arg4[%c2, %c0_29] : memref<16x64xf32, #tpu.memory_space<vmem>>, vector<1x64xf32>
    %c3 = arith.constant 3 : index
    %c0_30 = arith.constant 0 : index
    %90 = vector.load %arg4[%c3, %c0_30] : memref<16x64xf32, #tpu.memory_space<vmem>>, vector<1x64xf32>
    %c4 = arith.constant 4 : index
    %c0_31 = arith.constant 0 : index
    %91 = vector.load %arg4[%c4, %c0_31] : memref<16x64xf32, #tpu.memory_space<vmem>>, vector<1x64xf32>
    %c5 = arith.constant 5 : index
    %c0_32 = arith.constant 0 : index
    %92 = vector.load %arg4[%c5, %c0_32] : memref<16x64xf32, #tpu.memory_space<vmem>>, vector<1x64xf32>
    %c6 = arith.constant 6 : index
    %c0_33 = arith.constant 0 : index
    %93 = vector.load %arg4[%c6, %c0_33] : memref<16x64xf32, #tpu.memory_space<vmem>>, vector<1x64xf32>
    %c0_34 = arith.constant 0 : index
    %c0_35 = arith.constant 0 : index
    %94 = vector.load %arg1[%c0_34, %c0_35] : memref<128x192xf32, #tpu.memory_space<vmem>>, vector<64x192xf32>
    %c0_36 = arith.constant 0 : index
    %c0_37 = arith.constant 0 : index
    %95 = vector.load %arg2[%c0_36, %c0_37] : memref<384x64xf32, #tpu.memory_space<vmem>>, vector<64x64xf32>
    %c64 = arith.constant 64 : index
    %c0_38 = arith.constant 0 : index
    %96 = vector.load %arg2[%c64, %c0_38] : memref<384x64xf32, #tpu.memory_space<vmem>>, vector<64x64xf32>
    %c128 = arith.constant 128 : index
    %c0_39 = arith.constant 0 : index
    %97 = vector.load %arg2[%c128, %c0_39] : memref<384x64xf32, #tpu.memory_space<vmem>>, vector<64x64xf32>
    %c0_40 = arith.constant 0 : index
    %c0_41 = arith.constant 0 : index
    %98 = vector.load %arg3[%c0_40, %c0_41] : memref<8x192xf32, #tpu.memory_space<vmem>>, vector<4x192xf32>
    %99 = tpu.concatenate %98, %98 in 0 : vector<4x192xf32>, vector<4x192xf32> -> vector<8x192xf32>
    %cst_42 = arith.constant dense<0.000000e+00> : vector<8xf32>
    %100 = vector.multi_reduction <add>, %86, %cst_42 [1] : vector<8x64xf32> to vector<8xf32>
    %101 = vector.shape_cast %100 : vector<8xf32> to vector<8x1xf32>
    %cst_43 = arith.constant 6.400000e+01 : f32
    %102 = vector.broadcast %cst_43 : f32 to vector<8x1xf32>
    %103 = arith.divf %101, %102 : vector<8x1xf32>
    %104 = vector.broadcast %103 : vector<8x1xf32> to vector<8x64xf32>
    %105 = arith.subf %86, %104 : vector<8x64xf32>
    %106 = arith.mulf %105, %105 : vector<8x64xf32>
    %cst_44 = arith.constant dense<0.000000e+00> : vector<8xf32>
    %107 = vector.multi_reduction <add>, %106, %cst_44 [1] : vector<8x64xf32> to vector<8xf32>
    %108 = vector.shape_cast %107 : vector<8xf32> to vector<8x1xf32>
    %cst_45 = arith.constant 6.400000e+01 : f32
    %109 = vector.broadcast %cst_45 : f32 to vector<8x1xf32>
    %110 = arith.divf %108, %109 : vector<8x1xf32>
    %cst_46 = arith.constant 9.99999974E-6 : f32
    %111 = vector.broadcast %cst_46 : f32 to vector<8x1xf32>
    %112 = arith.addf %110, %111 : vector<8x1xf32>
    %113 = math.rsqrt %112 : vector<8x1xf32>
    %114 = vector.broadcast %113 : vector<8x1xf32> to vector<8x64xf32>
    %115 = arith.mulf %105, %114 : vector<8x64xf32>
    %116 = vector.broadcast %87 : vector<1x64xf32> to vector<8x64xf32>
    %117 = arith.mulf %115, %116 : vector<8x64xf32>
    %118 = vector.broadcast %88 : vector<1x64xf32> to vector<8x64xf32>
    %119 = arith.addf %117, %118 : vector<8x64xf32>
    %cst_47 = arith.constant dense<0.000000e+00> : vector<8x192xf32>
    %120 = tpu.matmul %119, %94, %cst_47 {dimension_numbers = #tpu.dot_dimension_numbers<[1], [0], [0], [1], [0, 0, 1, 1], [], []>} : vector<8x64xf32>, vector<64x192xf32>, vector<8x192xf32> -> vector<8x192xf32>
    %121 = arith.addf %120, %99 : vector<8x192xf32>
    %122 = vector.extract_strided_slice %121 {offsets = [0, 0], sizes = [8, 64], strides = [1, 1]} : vector<8x192xf32> to vector<8x64xf32>
    %123 = vector.extract_strided_slice %121 {offsets = [0, 64], sizes = [8, 64], strides = [1, 1]} : vector<8x192xf32> to vector<8x64xf32>
    %124 = vector.extract_strided_slice %121 {offsets = [0, 128], sizes = [8, 64], strides = [1, 1]} : vector<8x192xf32> to vector<8x64xf32>
    %125 = vector.extract_strided_slice %123 {offsets = [0, 0], sizes = [4, 64], strides = [1, 1]} : vector<8x64xf32> to vector<4x64xf32>
    %126 = tpu.concatenate %125, %125, %125, %125, %125, %125, %125, %125 in 0 : vector<4x64xf32>, vector<4x64xf32>, vector<4x64xf32>, vector<4x64xf32>, vector<4x64xf32>, vector<4x64xf32>, vector<4x64xf32>, vector<4x64xf32> -> vector<32x64xf32>
    %127 = vector.extract_strided_slice %123 {offsets = [4, 0], sizes = [4, 64], strides = [1, 1]} : vector<8x64xf32> to vector<4x64xf32>
    %128 = tpu.concatenate %127, %127, %127, %127, %127, %127, %127, %127 in 0 : vector<4x64xf32>, vector<4x64xf32>, vector<4x64xf32>, vector<4x64xf32>, vector<4x64xf32>, vector<4x64xf32>, vector<4x64xf32>, vector<4x64xf32> -> vector<32x64xf32>
    %129 = tpu.concatenate %126, %128 in 0 : vector<32x64xf32>, vector<32x64xf32> -> vector<64x64xf32>
    %130 = arith.mulf %129, %56 : vector<64x64xf32>
    %131 = vector.extract_strided_slice %124 {offsets = [0, 0], sizes = [4, 64], strides = [1, 1]} : vector<8x64xf32> to vector<4x64xf32>
    %132 = tpu.concatenate %131, %131, %131, %131, %131, %131, %131, %131 in 0 : vector<4x64xf32>, vector<4x64xf32>, vector<4x64xf32>, vector<4x64xf32>, vector<4x64xf32>, vector<4x64xf32>, vector<4x64xf32>, vector<4x64xf32> -> vector<32x64xf32>
    %133 = vector.extract_strided_slice %124 {offsets = [4, 0], sizes = [4, 64], strides = [1, 1]} : vector<8x64xf32> to vector<4x64xf32>
    %134 = tpu.concatenate %133, %133, %133, %133, %133, %133, %133, %133 in 0 : vector<4x64xf32>, vector<4x64xf32>, vector<4x64xf32>, vector<4x64xf32>, vector<4x64xf32>, vector<4x64xf32>, vector<4x64xf32>, vector<4x64xf32> -> vector<32x64xf32>
    %135 = tpu.concatenate %132, %134 in 0 : vector<32x64xf32>, vector<32x64xf32> -> vector<64x64xf32>
    %136 = arith.mulf %135, %56 : vector<64x64xf32>
    %cst_48 = arith.constant dense<0.000000e+00> : vector<8x64xf32>
    %137 = tpu.matmul %122, %130, %cst_48 {dimension_numbers = #tpu.dot_dimension_numbers<[1], [1], [0], [0], [0, 0, 1, 0], [], []>} : vector<8x64xf32>, vector<64x64xf32>, vector<8x64xf32> -> vector<8x64xf32>
    %cst_49 = arith.constant 0.353553385 : f32
    %138 = vector.broadcast %cst_49 : f32 to vector<8x64xf32>
    %139 = arith.mulf %137, %138 : vector<8x64xf32>
    %140 = arith.addf %139, %69 : vector<8x64xf32>
    %cst_50 = arith.constant dense<0xFF800000> : vector<8xf32>
    %141 = vector.multi_reduction <maximumf>, %140, %cst_50 [1] : vector<8x64xf32> to vector<8xf32>
    %142 = vector.shape_cast %141 : vector<8xf32> to vector<8x1xf32>
    %143 = vector.broadcast %142 : vector<8x1xf32> to vector<8x64xf32>
    %144 = arith.subf %140, %143 : vector<8x64xf32>
    %145 = math.exp %144 : vector<8x64xf32>
    %cst_51 = arith.constant dense<0.000000e+00> : vector<8x64xf32>
    %146 = tpu.matmul %145, %80, %cst_51 {dimension_numbers = #tpu.dot_dimension_numbers<[1], [0], [0], [1], [0, 0, 1, 1], [], []>} : vector<8x64xf32>, vector<64x64xf32>, vector<8x64xf32> -> vector<8x64xf32>
    %147 = arith.addf %146, %71 : vector<8x64xf32>
    %148 = tpu.reciprocal %147 {approx = true} : vector<8x64xf32> -> vector<8x64xf32>
    %149 = arith.mulf %145, %148 : vector<8x64xf32>
    %cst_52 = arith.constant dense<0.000000e+00> : vector<8x64xf32>
    %150 = tpu.matmul %149, %136, %cst_52 {dimension_numbers = #tpu.dot_dimension_numbers<[1], [0], [0], [1], [0, 0, 1, 1], [], []>} : vector<8x64xf32>, vector<64x64xf32>, vector<8x64xf32> -> vector<8x64xf32>
    %cst_53 = arith.constant dense<0.000000e+00> : vector<8x64xf32>
    %151 = tpu.matmul %150, %95, %cst_53 {dimension_numbers = #tpu.dot_dimension_numbers<[1], [0], [0], [1], [0, 0, 1, 1], [], []>} : vector<8x64xf32>, vector<64x64xf32>, vector<8x64xf32> -> vector<8x64xf32>
    %152 = arith.addf %86, %151 : vector<8x64xf32>
    %153 = vector.broadcast %89 : vector<1x64xf32> to vector<8x64xf32>
    %154 = arith.addf %152, %153 : vector<8x64xf32>
    %cst_54 = arith.constant dense<0.000000e+00> : vector<8xf32>
    %155 = vector.multi_reduction <add>, %154, %cst_54 [1] : vector<8x64xf32> to vector<8xf32>
    %156 = vector.shape_cast %155 : vector<8xf32> to vector<8x1xf32>
    %cst_55 = arith.constant 6.400000e+01 : f32
    %157 = vector.broadcast %cst_55 : f32 to vector<8x1xf32>
    %158 = arith.divf %156, %157 : vector<8x1xf32>
    %159 = vector.broadcast %158 : vector<8x1xf32> to vector<8x64xf32>
    %160 = arith.subf %154, %159 : vector<8x64xf32>
    %161 = arith.mulf %160, %160 : vector<8x64xf32>
    %cst_56 = arith.constant dense<0.000000e+00> : vector<8xf32>
    %162 = vector.multi_reduction <add>, %161, %cst_56 [1] : vector<8x64xf32> to vector<8xf32>
    %163 = vector.shape_cast %162 : vector<8xf32> to vector<8x1xf32>
    %cst_57 = arith.constant 6.400000e+01 : f32
    %164 = vector.broadcast %cst_57 : f32 to vector<8x1xf32>
    %165 = arith.divf %163, %164 : vector<8x1xf32>
    %cst_58 = arith.constant 9.99999974E-6 : f32
    %166 = vector.broadcast %cst_58 : f32 to vector<8x1xf32>
    %167 = arith.addf %165, %166 : vector<8x1xf32>
    %168 = math.rsqrt %167 : vector<8x1xf32>
    %169 = vector.broadcast %168 : vector<8x1xf32> to vector<8x64xf32>
    %170 = arith.mulf %160, %169 : vector<8x64xf32>
    %171 = vector.broadcast %90 : vector<1x64xf32> to vector<8x64xf32>
    %172 = arith.mulf %170, %171 : vector<8x64xf32>
    %173 = vector.broadcast %91 : vector<1x64xf32> to vector<8x64xf32>
    %174 = arith.addf %172, %173 : vector<8x64xf32>
    %cst_59 = arith.constant dense<0.000000e+00> : vector<8x64xf32>
    %175 = tpu.matmul %174, %96, %cst_59 {dimension_numbers = #tpu.dot_dimension_numbers<[1], [0], [0], [1], [0, 0, 1, 1], [], []>} : vector<8x64xf32>, vector<64x64xf32>, vector<8x64xf32> -> vector<8x64xf32>
    %176 = vector.broadcast %92 : vector<1x64xf32> to vector<8x64xf32>
    %177 = arith.addf %175, %176 : vector<8x64xf32>
    %cst_60 = arith.constant 0.000000e+00 : f32
    %178 = vector.broadcast %cst_60 : f32 to vector<8x64xf32>
    %179 = arith.maximumf %177, %178 : vector<8x64xf32>
    %cst_61 = arith.constant dense<0.000000e+00> : vector<8x64xf32>
    %180 = tpu.matmul %179, %97, %cst_61 {dimension_numbers = #tpu.dot_dimension_numbers<[1], [0], [0], [1], [0, 0, 1, 1], [], []>} : vector<8x64xf32>, vector<64x64xf32>, vector<8x64xf32> -> vector<8x64xf32>
    %181 = arith.addf %154, %180 : vector<8x64xf32>
    %182 = vector.broadcast %93 : vector<1x64xf32> to vector<8x64xf32>
    %183 = arith.addf %181, %182 : vector<8x64xf32>
    %c7 = arith.constant 7 : index
    %c0_62 = arith.constant 0 : index
    %184 = vector.load %arg4[%c7, %c0_62] : memref<16x64xf32, #tpu.memory_space<vmem>>, vector<1x64xf32>
    %c8 = arith.constant 8 : index
    %c0_63 = arith.constant 0 : index
    %185 = vector.load %arg4[%c8, %c0_63] : memref<16x64xf32, #tpu.memory_space<vmem>>, vector<1x64xf32>
    %c9 = arith.constant 9 : index
    %c0_64 = arith.constant 0 : index
    %186 = vector.load %arg4[%c9, %c0_64] : memref<16x64xf32, #tpu.memory_space<vmem>>, vector<1x64xf32>
    %c10 = arith.constant 10 : index
    %c0_65 = arith.constant 0 : index
    %187 = vector.load %arg4[%c10, %c0_65] : memref<16x64xf32, #tpu.memory_space<vmem>>, vector<1x64xf32>
    %c11 = arith.constant 11 : index
    %c0_66 = arith.constant 0 : index
    %188 = vector.load %arg4[%c11, %c0_66] : memref<16x64xf32, #tpu.memory_space<vmem>>, vector<1x64xf32>
    %c12 = arith.constant 12 : index
    %c0_67 = arith.constant 0 : index
    %189 = vector.load %arg4[%c12, %c0_67] : memref<16x64xf32, #tpu.memory_space<vmem>>, vector<1x64xf32>
    %c13 = arith.constant 13 : index
    %c0_68 = arith.constant 0 : index
    %190 = vector.load %arg4[%c13, %c0_68] : memref<16x64xf32, #tpu.memory_space<vmem>>, vector<1x64xf32>
    %c64_69 = arith.constant 64 : index
    %c0_70 = arith.constant 0 : index
    %191 = vector.load %arg1[%c64_69, %c0_70] : memref<128x192xf32, #tpu.memory_space<vmem>>, vector<64x192xf32>
    %c192 = arith.constant 192 : index
    %c0_71 = arith.constant 0 : index
    %192 = vector.load %arg2[%c192, %c0_71] : memref<384x64xf32, #tpu.memory_space<vmem>>, vector<64x64xf32>
    %c256 = arith.constant 256 : index
    %c0_72 = arith.constant 0 : index
    %193 = vector.load %arg2[%c256, %c0_72] : memref<384x64xf32, #tpu.memory_space<vmem>>, vector<64x64xf32>
    %c320 = arith.constant 320 : index
    %c0_73 = arith.constant 0 : index
    %194 = vector.load %arg2[%c320, %c0_73] : memref<384x64xf32, #tpu.memory_space<vmem>>, vector<64x64xf32>
    %c4_74 = arith.constant 4 : index
    %c0_75 = arith.constant 0 : index
    %195 = vector.load %arg3[%c4_74, %c0_75] : memref<8x192xf32, #tpu.memory_space<vmem>>, vector<4x192xf32>
    %196 = tpu.concatenate %195, %195 in 0 : vector<4x192xf32>, vector<4x192xf32> -> vector<8x192xf32>
    %cst_76 = arith.constant dense<0.000000e+00> : vector<8xf32>
    %197 = vector.multi_reduction <add>, %183, %cst_76 [1] : vector<8x64xf32> to vector<8xf32>
    %198 = vector.shape_cast %197 : vector<8xf32> to vector<8x1xf32>
    %cst_77 = arith.constant 6.400000e+01 : f32
    %199 = vector.broadcast %cst_77 : f32 to vector<8x1xf32>
    %200 = arith.divf %198, %199 : vector<8x1xf32>
    %201 = vector.broadcast %200 : vector<8x1xf32> to vector<8x64xf32>
    %202 = arith.subf %183, %201 : vector<8x64xf32>
    %203 = arith.mulf %202, %202 : vector<8x64xf32>
    %cst_78 = arith.constant dense<0.000000e+00> : vector<8xf32>
    %204 = vector.multi_reduction <add>, %203, %cst_78 [1] : vector<8x64xf32> to vector<8xf32>
    %205 = vector.shape_cast %204 : vector<8xf32> to vector<8x1xf32>
    %cst_79 = arith.constant 6.400000e+01 : f32
    %206 = vector.broadcast %cst_79 : f32 to vector<8x1xf32>
    %207 = arith.divf %205, %206 : vector<8x1xf32>
    %cst_80 = arith.constant 9.99999974E-6 : f32
    %208 = vector.broadcast %cst_80 : f32 to vector<8x1xf32>
    %209 = arith.addf %207, %208 : vector<8x1xf32>
    %210 = math.rsqrt %209 : vector<8x1xf32>
    %211 = vector.broadcast %210 : vector<8x1xf32> to vector<8x64xf32>
    %212 = arith.mulf %202, %211 : vector<8x64xf32>
    %213 = vector.broadcast %184 : vector<1x64xf32> to vector<8x64xf32>
    %214 = arith.mulf %212, %213 : vector<8x64xf32>
    %215 = vector.broadcast %185 : vector<1x64xf32> to vector<8x64xf32>
    %216 = arith.addf %214, %215 : vector<8x64xf32>
    %cst_81 = arith.constant dense<0.000000e+00> : vector<8x192xf32>
    %217 = tpu.matmul %216, %191, %cst_81 {dimension_numbers = #tpu.dot_dimension_numbers<[1], [0], [0], [1], [0, 0, 1, 1], [], []>} : vector<8x64xf32>, vector<64x192xf32>, vector<8x192xf32> -> vector<8x192xf32>
    %218 = arith.addf %217, %196 : vector<8x192xf32>
    %219 = vector.extract_strided_slice %218 {offsets = [0, 0], sizes = [8, 64], strides = [1, 1]} : vector<8x192xf32> to vector<8x64xf32>
    %220 = vector.extract_strided_slice %218 {offsets = [0, 64], sizes = [8, 64], strides = [1, 1]} : vector<8x192xf32> to vector<8x64xf32>
    %221 = vector.extract_strided_slice %218 {offsets = [0, 128], sizes = [8, 64], strides = [1, 1]} : vector<8x192xf32> to vector<8x64xf32>
    %222 = vector.extract_strided_slice %220 {offsets = [0, 0], sizes = [4, 64], strides = [1, 1]} : vector<8x64xf32> to vector<4x64xf32>
    %223 = tpu.concatenate %222, %222, %222, %222, %222, %222, %222, %222 in 0 : vector<4x64xf32>, vector<4x64xf32>, vector<4x64xf32>, vector<4x64xf32>, vector<4x64xf32>, vector<4x64xf32>, vector<4x64xf32>, vector<4x64xf32> -> vector<32x64xf32>
    %224 = vector.extract_strided_slice %220 {offsets = [4, 0], sizes = [4, 64], strides = [1, 1]} : vector<8x64xf32> to vector<4x64xf32>
    %225 = tpu.concatenate %224, %224, %224, %224, %224, %224, %224, %224 in 0 : vector<4x64xf32>, vector<4x64xf32>, vector<4x64xf32>, vector<4x64xf32>, vector<4x64xf32>, vector<4x64xf32>, vector<4x64xf32>, vector<4x64xf32> -> vector<32x64xf32>
    %226 = tpu.concatenate %223, %225 in 0 : vector<32x64xf32>, vector<32x64xf32> -> vector<64x64xf32>
    %227 = arith.mulf %226, %56 : vector<64x64xf32>
    %228 = vector.extract_strided_slice %221 {offsets = [0, 0], sizes = [4, 64], strides = [1, 1]} : vector<8x64xf32> to vector<4x64xf32>
    %229 = tpu.concatenate %228, %228, %228, %228, %228, %228, %228, %228 in 0 : vector<4x64xf32>, vector<4x64xf32>, vector<4x64xf32>, vector<4x64xf32>, vector<4x64xf32>, vector<4x64xf32>, vector<4x64xf32>, vector<4x64xf32> -> vector<32x64xf32>
    %230 = vector.extract_strided_slice %221 {offsets = [4, 0], sizes = [4, 64], strides = [1, 1]} : vector<8x64xf32> to vector<4x64xf32>
    %231 = tpu.concatenate %230, %230, %230, %230, %230, %230, %230, %230 in 0 : vector<4x64xf32>, vector<4x64xf32>, vector<4x64xf32>, vector<4x64xf32>, vector<4x64xf32>, vector<4x64xf32>, vector<4x64xf32>, vector<4x64xf32> -> vector<32x64xf32>
    %232 = tpu.concatenate %229, %231 in 0 : vector<32x64xf32>, vector<32x64xf32> -> vector<64x64xf32>
    %233 = arith.mulf %232, %56 : vector<64x64xf32>
    %cst_82 = arith.constant dense<0.000000e+00> : vector<8x64xf32>
    %234 = tpu.matmul %219, %227, %cst_82 {dimension_numbers = #tpu.dot_dimension_numbers<[1], [1], [0], [0], [0, 0, 1, 0], [], []>} : vector<8x64xf32>, vector<64x64xf32>, vector<8x64xf32> -> vector<8x64xf32>
    %cst_83 = arith.constant 0.353553385 : f32
    %235 = vector.broadcast %cst_83 : f32 to vector<8x64xf32>
    %236 = arith.mulf %234, %235 : vector<8x64xf32>
    %237 = arith.addf %236, %69 : vector<8x64xf32>
    %cst_84 = arith.constant dense<0xFF800000> : vector<8xf32>
    %238 = vector.multi_reduction <maximumf>, %237, %cst_84 [1] : vector<8x64xf32> to vector<8xf32>
    %239 = vector.shape_cast %238 : vector<8xf32> to vector<8x1xf32>
    %240 = vector.broadcast %239 : vector<8x1xf32> to vector<8x64xf32>
    %241 = arith.subf %237, %240 : vector<8x64xf32>
    %242 = math.exp %241 : vector<8x64xf32>
    %cst_85 = arith.constant dense<0.000000e+00> : vector<8x64xf32>
    %243 = tpu.matmul %242, %80, %cst_85 {dimension_numbers = #tpu.dot_dimension_numbers<[1], [0], [0], [1], [0, 0, 1, 1], [], []>} : vector<8x64xf32>, vector<64x64xf32>, vector<8x64xf32> -> vector<8x64xf32>
    %244 = arith.addf %243, %71 : vector<8x64xf32>
    %245 = tpu.reciprocal %244 {approx = true} : vector<8x64xf32> -> vector<8x64xf32>
    %246 = arith.mulf %242, %245 : vector<8x64xf32>
    %cst_86 = arith.constant dense<0.000000e+00> : vector<8x64xf32>
    %247 = tpu.matmul %246, %233, %cst_86 {dimension_numbers = #tpu.dot_dimension_numbers<[1], [0], [0], [1], [0, 0, 1, 1], [], []>} : vector<8x64xf32>, vector<64x64xf32>, vector<8x64xf32> -> vector<8x64xf32>
    %cst_87 = arith.constant dense<0.000000e+00> : vector<8x64xf32>
    %248 = tpu.matmul %247, %192, %cst_87 {dimension_numbers = #tpu.dot_dimension_numbers<[1], [0], [0], [1], [0, 0, 1, 1], [], []>} : vector<8x64xf32>, vector<64x64xf32>, vector<8x64xf32> -> vector<8x64xf32>
    %249 = arith.addf %183, %248 : vector<8x64xf32>
    %250 = vector.broadcast %186 : vector<1x64xf32> to vector<8x64xf32>
    %251 = arith.addf %249, %250 : vector<8x64xf32>
    %cst_88 = arith.constant dense<0.000000e+00> : vector<8xf32>
    %252 = vector.multi_reduction <add>, %251, %cst_88 [1] : vector<8x64xf32> to vector<8xf32>
    %253 = vector.shape_cast %252 : vector<8xf32> to vector<8x1xf32>
    %cst_89 = arith.constant 6.400000e+01 : f32
    %254 = vector.broadcast %cst_89 : f32 to vector<8x1xf32>
    %255 = arith.divf %253, %254 : vector<8x1xf32>
    %256 = vector.broadcast %255 : vector<8x1xf32> to vector<8x64xf32>
    %257 = arith.subf %251, %256 : vector<8x64xf32>
    %258 = arith.mulf %257, %257 : vector<8x64xf32>
    %cst_90 = arith.constant dense<0.000000e+00> : vector<8xf32>
    %259 = vector.multi_reduction <add>, %258, %cst_90 [1] : vector<8x64xf32> to vector<8xf32>
    %260 = vector.shape_cast %259 : vector<8xf32> to vector<8x1xf32>
    %cst_91 = arith.constant 6.400000e+01 : f32
    %261 = vector.broadcast %cst_91 : f32 to vector<8x1xf32>
    %262 = arith.divf %260, %261 : vector<8x1xf32>
    %cst_92 = arith.constant 9.99999974E-6 : f32
    %263 = vector.broadcast %cst_92 : f32 to vector<8x1xf32>
    %264 = arith.addf %262, %263 : vector<8x1xf32>
    %265 = math.rsqrt %264 : vector<8x1xf32>
    %266 = vector.broadcast %265 : vector<8x1xf32> to vector<8x64xf32>
    %267 = arith.mulf %257, %266 : vector<8x64xf32>
    %268 = vector.broadcast %187 : vector<1x64xf32> to vector<8x64xf32>
    %269 = arith.mulf %267, %268 : vector<8x64xf32>
    %270 = vector.broadcast %188 : vector<1x64xf32> to vector<8x64xf32>
    %271 = arith.addf %269, %270 : vector<8x64xf32>
    %cst_93 = arith.constant dense<0.000000e+00> : vector<8x64xf32>
    %272 = tpu.matmul %271, %193, %cst_93 {dimension_numbers = #tpu.dot_dimension_numbers<[1], [0], [0], [1], [0, 0, 1, 1], [], []>} : vector<8x64xf32>, vector<64x64xf32>, vector<8x64xf32> -> vector<8x64xf32>
    %273 = vector.broadcast %189 : vector<1x64xf32> to vector<8x64xf32>
    %274 = arith.addf %272, %273 : vector<8x64xf32>
    %cst_94 = arith.constant 0.000000e+00 : f32
    %275 = vector.broadcast %cst_94 : f32 to vector<8x64xf32>
    %276 = arith.maximumf %274, %275 : vector<8x64xf32>
    %cst_95 = arith.constant dense<0.000000e+00> : vector<8x64xf32>
    %277 = tpu.matmul %276, %194, %cst_95 {dimension_numbers = #tpu.dot_dimension_numbers<[1], [0], [0], [1], [0, 0, 1, 1], [], []>} : vector<8x64xf32>, vector<64x64xf32>, vector<8x64xf32> -> vector<8x64xf32>
    %278 = arith.addf %251, %277 : vector<8x64xf32>
    %279 = vector.broadcast %190 : vector<1x64xf32> to vector<8x64xf32>
    %280 = arith.addf %278, %279 : vector<8x64xf32>
    %c14 = arith.constant 14 : index
    %c0_96 = arith.constant 0 : index
    %281 = vector.load %arg4[%c14, %c0_96] : memref<16x64xf32, #tpu.memory_space<vmem>>, vector<1x64xf32>
    %c15 = arith.constant 15 : index
    %c0_97 = arith.constant 0 : index
    %282 = vector.load %arg4[%c15, %c0_97] : memref<16x64xf32, #tpu.memory_space<vmem>>, vector<1x64xf32>
    %cst_98 = arith.constant dense<0.000000e+00> : vector<8xf32>
    %283 = vector.multi_reduction <add>, %280, %cst_98 [1] : vector<8x64xf32> to vector<8xf32>
    %284 = vector.shape_cast %283 : vector<8xf32> to vector<8x1xf32>
    %cst_99 = arith.constant 6.400000e+01 : f32
    %285 = vector.broadcast %cst_99 : f32 to vector<8x1xf32>
    %286 = arith.divf %284, %285 : vector<8x1xf32>
    %287 = vector.broadcast %286 : vector<8x1xf32> to vector<8x64xf32>
    %288 = arith.subf %280, %287 : vector<8x64xf32>
    %289 = arith.mulf %288, %288 : vector<8x64xf32>
    %cst_100 = arith.constant dense<0.000000e+00> : vector<8xf32>
    %290 = vector.multi_reduction <add>, %289, %cst_100 [1] : vector<8x64xf32> to vector<8xf32>
    %291 = vector.shape_cast %290 : vector<8xf32> to vector<8x1xf32>
    %cst_101 = arith.constant 6.400000e+01 : f32
    %292 = vector.broadcast %cst_101 : f32 to vector<8x1xf32>
    %293 = arith.divf %291, %292 : vector<8x1xf32>
    %cst_102 = arith.constant 9.99999974E-6 : f32
    %294 = vector.broadcast %cst_102 : f32 to vector<8x1xf32>
    %295 = arith.addf %293, %294 : vector<8x1xf32>
    %296 = math.rsqrt %295 : vector<8x1xf32>
    %297 = vector.broadcast %296 : vector<8x1xf32> to vector<8x64xf32>
    %298 = arith.mulf %288, %297 : vector<8x64xf32>
    %299 = vector.broadcast %281 : vector<1x64xf32> to vector<8x64xf32>
    %300 = arith.mulf %298, %299 : vector<8x64xf32>
    %301 = vector.broadcast %282 : vector<1x64xf32> to vector<8x64xf32>
    %302 = arith.addf %300, %301 : vector<8x64xf32>
    %303 = arith.negf %302 : vector<8x64xf32>
    %304 = math.exp %303 : vector<8x64xf32>
    %cst_103 = arith.constant 1.000000e+00 : f32
    %305 = vector.broadcast %cst_103 : f32 to vector<8x64xf32>
    %306 = arith.addf %305, %304 : vector<8x64xf32>
    %307 = arith.divf %305, %306 : vector<8x64xf32>
    %308 = arith.mulf %307, %81 : vector<8x64xf32>
    %309 = tpu.concatenate %308, %302 in 1 : vector<8x64xf32>, vector<8x64xf32> -> vector<8x128xf32>
    %c0_104 = arith.constant 0 : index
    %c0_105 = arith.constant 0 : index
    %310 = vector.load %arg5[%c0_104, %c0_105] : memref<8x128xf32, #tpu.memory_space<vmem>>, vector<8x128xf32>
    tpu.vector_store %arg5[%c0_104, %c0_105], %309 {strides = array<i32>} : memref<8x128xf32, #tpu.memory_space<vmem>>, vector<8x128xf32>,
    return
  }
}

</mosaic_0001>

<llo_original>
// kernel: compress_model_forward.1
$region0: #{compress_model_forward.1}
  #allocation0 [shape = 'u32[]', space=smem, size = 0x4, offset = 0x4, fixed_abs, tag = 'smem constant byte address 0x4 - core index']
  #allocation1 [shape = 'u32[72,128]{1,0:T(1,128)}', space=vmem, size = 0x9000, scoped, tag = 'internal scratch']
  %s0 = inlined_call_operand.vmem [shape: f32[8,64], index: 0, kind: input, shape index: {}]
  %s1 = inlined_call_operand.vmem [shape: f32[128,192], index: 1, kind: input, shape index: {}]
  %s2 = inlined_call_operand.vmem [shape: f32[384,64], index: 2, kind: input, shape index: {}]
  %s3 = inlined_call_operand.vmem [shape: f32[8,192], index: 3, kind: input, shape index: {}]
  %s4 = inlined_call_operand.vmem [shape: f32[16,64], index: 4, kind: input, shape index: {}]
  %s5 = inlined_call_operand.vmem [shape: f32[8,128], index: 5, kind: output, shape index: {}]
  %s6 = sld [smem:[#allocation0]]
  $region30: #{compress_model_forward.1} parent=0
    _
  %s8 = ssub.s32 1, %s6
  %s9 = scalar_select 0, %s8, %s6
  // Predicated region
  $region2: #{compress_model_forward.1} parent=0 // pred_check
    _
  $region3: #{compress_model_forward.1} parent=0 // pred_check_branch
    %11 = sbr.rel (0) target = $region5
  $region4: #{compress_model_forward.1} parent=0 // pred_region
    _
  $region5: #{compress_model_forward.1} parent=0 // pred_fallthru
    _
  // Predicated region
  $region6: #{compress_model_forward.1} parent=0 // pred_check
    _
  $region7: #{compress_model_forward.1} parent=0 // pred_check_branch
    %13 = sbr.rel (0) target = $region9
  $region8: #{compress_model_forward.1} parent=0 // pred_region
    _
  $region9: #{compress_model_forward.1} parent=0 // pred_fallthru
    _
  // Predicated region
  $region10: #{compress_model_forward.1} parent=0 // pred_check
    _
  $region11: #{compress_model_forward.1} parent=0 // pred_check_branch
    %15 = sbr.rel (0) target = $region13
  $region12: #{compress_model_forward.1} parent=0 // pred_region
    _
  $region13: #{compress_model_forward.1} parent=0 // pred_fallthru
    _
  // Predicated region
  $region14: #{compress_model_forward.1} parent=0 // pred_check
    _
  $region15: #{compress_model_forward.1} parent=0 // pred_check_branch
    %17 = sbr.rel (0) target = $region17
  $region16: #{compress_model_forward.1} parent=0 // pred_region
    _
  $region17: #{compress_model_forward.1} parent=0 // pred_fallthru
    _
  // Predicated region
  $region18: #{compress_model_forward.1} parent=0 // pred_check
    _
  $region19: #{compress_model_forward.1} parent=0 // pred_check_branch
    %19 = sbr.rel (0) target = $region21
  $region20: #{compress_model_forward.1} parent=0 // pred_region
    _
  $region21: #{compress_model_forward.1} parent=0 // pred_fallthru
    _
  %v20 = vlaneseq
  %v21 = vshrl.u32 %v20, 7
  %v22 = vlaneseq
  %v23 = vand.u32 %v22, 127
  %v24 = vand.u32 %v21, 3
  %v25 = vshra.s32 %v24, 1
  %v26 = vand.u32 %v21, 1
  %v27 = vand.u32 %v23, 3
  %v28 = vshra.s32 %v27, 1
  %v29 = vand.u32 %v23, 1
  %v30 = vsub.s32 %v25, %v28
  %v31 = vcvt.s32.f32 %v30
  %v32 = vand.u32 2147483647, %v31
  %v33 = vsub.s32 %v26, %v29
  %v34 = vcvt.s32.f32 %v33
  %v35 = vand.u32 2147483647, %v34
  %vm36 = vcmp.lt.f32.partialorder %v32, 0.5
  %vm37 = vcmp.lt.f32.partialorder %v32, 1.5
  %v38 = vsel %vm37, 0.25, 0.0
  %v39 = vsel %vm36, 0.5, %v38
  %vm40 = vcmp.lt.f32.partialorder %v35, 0.5
  %vm41 = vcmp.lt.f32.partialorder %v35, 1.5
  %v42 = vsel %vm41, 0.25, 0.0
  %v43 = vsel %vm40, 0.5, %v42
  %v44 = vshra.s32 %v21, 2
  %v45 = vshra.s32 %v23, 2
  %vm46 = vcmp.eq.s32.totalorder %v44, %v45
  %v47 = vmul.f32 %v39, %v43
  %v48 = vsel %vm46, %v47, 0.0
  %v49 = vadd.s32 %v21, 8
  %v50 = vadd.s32 %v21, 16
  %v51 = vadd.s32 %v21, 24
  %v52 = vadd.s32 %v21, 32
  %v53 = vadd.s32 %v21, 40
  %v54 = vadd.s32 %v21, 48
  %v55 = vadd.s32 %v21, 56
  %v56 = vshra.s32 %v49, 2
  %v57 = vshra.s32 %v50, 2
  %v58 = vshra.s32 %v51, 2
  %v59 = vshra.s32 %v52, 2
  %v60 = vshra.s32 %v53, 2
  %v61 = vshra.s32 %v54, 2
  %v62 = vshra.s32 %v55, 2
  %v63 = vand.u32 %v44, 7
  %v64 = vand.u32 %v56, 7
  %v65 = vand.u32 %v57, 7
  %v66 = vand.u32 %v58, 7
  %v67 = vand.u32 %v59, 7
  %v68 = vand.u32 %v60, 7
  %v69 = vand.u32 %v61, 7
  %v70 = vand.u32 %v62, 7
  %v71 = vshra.s32 %v23, 3
  %vm72 = vcmp.eq.s32.totalorder %v63, %v71
  %vm73 = vcmp.eq.s32.totalorder %v64, %v71
  %vm74 = vcmp.eq.s32.totalorder %v65, %v71
  %vm75 = vcmp.eq.s32.totalorder %v66, %v71
  %vm76 = vcmp.eq.s32.totalorder %v67, %v71
  %vm77 = vcmp.eq.s32.totalorder %v68, %v71
  %vm78 = vcmp.eq.s32.totalorder %v69, %v71
  %vm79 = vcmp.eq.s32.totalorder %v70, %v71
  %v80 = vsel %vm72, 1, 0
  %v81 = vsel %vm73, 1, 0
  %v82 = vsel %vm74, 1, 0
  %v83 = vsel %vm75, 1, 0
  %v84 = vsel %vm76, 1, 0
  %v85 = vsel %vm77, 1, 0
  %v86 = vsel %vm78, 1, 0
  %v87 = vsel %vm79, 1, 0
  %v88 = vcvt.s32.f32 %v80
  %v89 = vcvt.s32.f32 %v81
  %v90 = vcvt.s32.f32 %v82
  %v91 = vcvt.s32.f32 %v83
  %v92 = vcvt.s32.f32 %v84
  %v93 = vcvt.s32.f32 %v85
  %v94 = vcvt.s32.f32 %v86
  %v95 = vcvt.s32.f32 %v87
  %v96 = vshra.s32 %v23, 5
  %vm97 = vcmp.eq.s32.totalorder %v44, %v96
  %v98 = vsel %vm97, 1, 0
  %v99 = vcvt.s32.f32 %v98
  %v100 = vsub.f32 %v99, 1.0
  %v101 = vmul.f32 %v100, 1e+09
  %v102 = vsub.f32 1.0, %v99
  %vm103 = vcmp.eq.s32.totalorder %v56, %v45
  %vm104 = vcmp.eq.s32.totalorder %v57, %v45
  %vm105 = vcmp.eq.s32.totalorder %v58, %v45
  %vm106 = vcmp.eq.s32.totalorder %v59, %v45
  %vm107 = vcmp.eq.s32.totalorder %v60, %v45
  %vm108 = vcmp.eq.s32.totalorder %v61, %v45
  %vm109 = vcmp.eq.s32.totalorder %v62, %v45
  %v110 = vsel %vm46, 1, 0
  %v111 = vsel %vm103, 1, 0
  %v112 = vsel %vm104, 1, 0
  %v113 = vsel %vm105, 1, 0
  %v114 = vsel %vm106, 1, 0
  %v115 = vsel %vm107, 1, 0
  %v116 = vsel %vm108, 1, 0
  %v117 = vsel %vm109, 1, 0
  %v118 = vcvt.s32.f32 %v110
  %v119 = vcvt.s32.f32 %v111
  %v120 = vcvt.s32.f32 %v112
  %v121 = vcvt.s32.f32 %v113
  %v122 = vcvt.s32.f32 %v114
  %v123 = vcvt.s32.f32 %v115
  %v124 = vcvt.s32.f32 %v116
  %v125 = vcvt.s32.f32 %v117
  %v126 = vld [vmem:[%s0] sm:$0xff]
  %v127 = vmul.f32 %v126, %v126
  %vm128 = vcmask 64512
  %v130 = vsel %vm128, %v48, 0
  %132 = vmatpush.msra.mxu0 0.0
  %133 = vmatpush.msra.mxu0 0.0
  %134 = vmatpush.msra.mxu0 0.0
  %135 = vmatpush.msra.mxu0 0.0
  %136 = vmatpush.msra.mxu0 0.0
  %137 = vmatpush.msra.mxu0 0.0
  %138 = vmatpush.msra.mxu0 0.0
  %139 = vmatpush.msra.mxu0 0.0
  %140 = vmatpush.msra.mxu0 0.0
  %141 = vmatpush.msra.mxu0 0.0
  %142 = vmatpush.msra.mxu0 0.0
  %143 = vmatpush.msra.mxu0 0.0
  %144 = vmatpush.msra.mxu0 0.0
  %145 = vmatpush.msra.mxu0 0.0
  %146 = vmatpush.msra.mxu0 0.0
  %147 = vmatpush.msra.mxu0 %v127
  %148 = vmatmul.f32.gmra.mxu0 %v130
  %v149 = vpop.f32.mrf.mxu0
  %v150 = vadd.f32 1e-12, %v149
  %151 = vdwg.mxu0
  %v152 = vrsqrt.pop %v150
  %v153 = vmul.f32 %v152, %v150
  %v154 = vmul.f32 %v153, %v152
  %v155 = vmul.f32 0.5, %v154
  %v156 = vsub.f32 1.5, %v155
  %v157 = vmul.f32 %v152, %v156
  %v158 = vmul.f32 %v150, %v157
  %vm159 = vcmp.eq.f32.partialorder %v150, inf
  %v160 = vsel %vm159, %v150, %v158
  %vm161 = vcmp.eq.f32.partialorder %v150, 0.0
  %v162 = vand.u32 %v150, 2147483648
  %v163 = vsel %vm161, %v162, %v160
  %v164 = vld [vmem:[%s4] sm:$0x1]
  %v165 = vld [vmem:[%s4 + $0x1] sm:$0x1]
  %v166 = vld [vmem:[%s4 + $0x2] sm:$0x1]
  %v167 = vld [vmem:[%s4 + $0x3] sm:$0x1]
  %v168 = vld [vmem:[%s4 + $0x4] sm:$0x1]
  %v169 = vld [vmem:[%s4 + $0x5] sm:$0x1]
  %v170 = vld [vmem:[%s4 + $0x6] sm:$0x1]
  %v171 = vld [vmem:[%s1] sm:$0xff]
  %v172 = vld [vmem:[%s1 + $0x8] sm:$0xff]
  %v173 = vld [vmem:[%s1 + $0x10] sm:$0xff]
  %v174 = vld [vmem:[%s1 + $0x18] sm:$0xff]
  %v175 = vld [vmem:[%s1 + $0x20] sm:$0xff]
  %v176 = vld [vmem:[%s1 + $0x28] sm:$0xff]
  %v177 = vld [vmem:[%s1 + $0x30] sm:$0xff]
  %v178 = vld [vmem:[%s1 + $0x38] sm:$0xff]
  %v179 = vld [vmem:[%s1 + $0x40] sm:$0xff]
  %v180 = vld [vmem:[%s1 + $0x48] sm:$0xff]
  %v181 = vld [vmem:[%s1 + $0x50] sm:$0xff]
  %v182 = vld [vmem:[%s1 + $0x58] sm:$0xff]
  %v183 = vld [vmem:[%s1 + $0x60] sm:$0xff]
  %v184 = vld [vmem:[%s1 + $0x68] sm:$0xff]
  %v185 = vld [vmem:[%s1 + $0x70] sm:$0xff]
  %v186 = vld [vmem:[%s1 + $0x78] sm:$0xff]
  %v187 = vld [vmem:[%s2] sm:$0xff]
  %v188 = vld [vmem:[%s2 + $0x8] sm:$0xff]
  %v189 = vld [vmem:[%s2 + $0x10] sm:$0xff]
  %v190 = vld [vmem:[%s2 + $0x18] sm:$0xff]
  %v191 = vld [vmem:[%s2 + $0x20] sm:$0xff]
  %v192 = vld [vmem:[%s2 + $0x28] sm:$0xff]
  %v193 = vld [vmem:[%s2 + $0x30] sm:$0xff]
  %v194 = vld [vmem:[%s2 + $0x38] sm:$0xff]
  %v195 = vld [vmem:[%s2 + $0x40] sm:$0xff]
  %v196 = vld [vmem:[%s2 + $0x48] sm:$0xff]
  %v197 = vld [vmem:[%s2 + $0x50] sm:$0xff]
  %v198 = vld [vmem:[%s2 + $0x58] sm:$0xff]
  %v199 = vld [vmem:[%s2 + $0x60] sm:$0xff]
  %v200 = vld [vmem:[%s2 + $0x68] sm:$0xff]
  %v201 = vld [vmem:[%s2 + $0x70] sm:$0xff]
  %v202 = vld [vmem:[%s2 + $0x78] sm:$0xff]
  %v203 = vld [vmem:[%s2 + $0x80] sm:$0xff]
  %v204 = vld [vmem:[%s2 + $0x88] sm:$0xff]
  %v205 = vld [vmem:[%s2 + $0x90] sm:$0xff]
  %v206 = vld [vmem:[%s2 + $0x98] sm:$0xff]
  %v207 = vld [vmem:[%s2 + $0xa0] sm:$0xff]
  %v208 = vld [vmem:[%s2 + $0xa8] sm:$0xff]
  %v209 = vld [vmem:[%s2 + $0xb0] sm:$0xff]
  %v210 = vld [vmem:[%s2 + $0xb8] sm:$0xff]
  %v211 = vld [vmem:[%s3] sm:$0xf]
  %v212 = vld [vmem:[%s3 + $0x8] sm:$0xf]
  %v215 = vrot.slane %v211, 4
  %v216 = vrot.slane %v212, 4
  %vm219 = vcmask 1043456
  %v220 = vsel %vm219, %v211, %v215
  %v221 = vsel %vm219, %v212, %v216
  %vm222 = vcmask 523264
  %v223 = vsel %vm222, %v163, 0.0
  %224 = vadd.xlane.f32.xlu0 %v223
  %v225 = vpop.xlane.xlu0 %224
  %v226 = vrcp.pop 64.0
  %v227 = vmul.f32 64.0, %v226
  %v228 = vsub.f32 1.0, %v227
  %v229 = vmul.f32 %v226, %v228
  %v230 = vadd.f32 %v226, %v229
  %vm231 = vweird.f32 %v226
  %v232 = vsel %vm231, %v226, %v230
  %v233 = vmul.f32 %v225, %v232
  %v234 = vsub.f32 %v163, %v233
  %v235 = vmul.f32 %v234, %v234
  %v236 = vsel %vm222, %v235, 0.0
  %237 = vadd.xlane.f32.xlu0 %v236
  %v238 = vpop.xlane.xlu0 %237
  %v239 = vmul.f32 %v238, %v232
  %v240 = vadd.f32 %v239, 1e-05
  %v241 = vrsqrt.pop %v240
  %v242 = vmul.f32 %v241, %v240
  %v243 = vmul.f32 %v242, %v241
  %v244 = vmul.f32 0.5, %v243
  %v245 = vsub.f32 1.5, %v244
  %v246 = vmul.f32 %v241, %v245
  %vm247 = vweird.f32 %v240
  %vm248 = vweird.f32 %v241
  %vm249 = vmor %vm247, %vm248
  %v250 = vsel %vm249, %v241, %v246
  %v251 = vmul.f32 %v234, %v250
  %v252 = vperm.slane %v164, 0
  %v253 = vmul.f32 %v251, %v252
  %v254 = vperm.slane %v165, 0
  %v255 = vadd.f32 %v253, %v254
  %v257 = vsel %vm222, %v255, 0
  %259 = vmatpush.msra.mxu0 0.0
  %260 = vmatpush.msra.mxu0 0.0
  %261 = vmatpush.msra.mxu0 0.0
  %262 = vmatpush.msra.mxu0 0.0
  %263 = vmatpush.msra.mxu0 0.0
  %264 = vmatpush.msra.mxu0 0.0
  %265 = vmatpush.msra.mxu0 0.0
  %266 = vmatpush.msra.mxu0 0.0
  %267 = vmatpush.msra.mxu0 %v185
  %268 = vmatpush.msra.mxu0 %v183
  %269 = vmatpush.msra.mxu0 %v181
  %270 = vmatpush.msra.mxu0 %v179
  %271 = vmatpush.msra.mxu0 %v177
  %272 = vmatpush.msra.mxu0 %v175
  %273 = vmatpush.msra.mxu0 %v173
  %274 = vmatpush.msra.mxu0 %v171
  %275 = vmatmul.f32.gmra.mxu0 %v257
  %v276 = vpop.f32.mrf.mxu0
  %v277 = vadd.f32 %v220, %v276
  %278 = vdwg.mxu0
  %279 = vmatpush.msra.mxu0 0.0
  %280 = vmatpush.msra.mxu0 0.0
  %281 = vmatpush.msra.mxu0 0.0
  %282 = vmatpush.msra.mxu0 0.0
  %283 = vmatpush.msra.mxu0 0.0
  %284 = vmatpush.msra.mxu0 0.0
  %285 = vmatpush.msra.mxu0 0.0
  %286 = vmatpush.msra.mxu0 0.0
  %287 = vmatpush.msra.mxu0 %v186
  %288 = vmatpush.msra.mxu0 %v184
  %289 = vmatpush.msra.mxu0 %v182
  %290 = vmatpush.msra.mxu0 %v180
  %291 = vmatpush.msra.mxu0 %v178
  %292 = vmatpush.msra.mxu0 %v176
  %293 = vmatpush.msra.mxu0 %v174
  %294 = vmatpush.msra.mxu0 %v172
  %295 = vmatmul.f32.gmra.mxu0 %v257
  %v296 = vpop.f32.mrf.mxu0
  %v297 = vadd.f32 %v221, %v296
  %298 = vdwg.mxu0
  %v300 = vrot.slane %v277, 4
  %v302 = vsel %vm219, %v277, %v300
  %v303 = vsel %vm219, %v300, %v277
  %312 = vrot.lane.b32.xlu0 %v88, 64
  %v313 = vpop.permute.xlu0 %312
  %314 = vrot.lane.b32.xlu0 %v89, 64
  %v315 = vpop.permute.xlu0 %314
  %316 = vrot.lane.b32.xlu0 %v90, 64
  %v317 = vpop.permute.xlu0 %316
  %318 = vrot.lane.b32.xlu0 %v91, 64
  %v319 = vpop.permute.xlu0 %318
  %320 = vrot.lane.b32.xlu0 %v92, 64
  %v321 = vpop.permute.xlu0 %320
  %322 = vrot.lane.b32.xlu0 %v93, 64
  %v323 = vpop.permute.xlu0 %322
  %324 = vrot.lane.b32.xlu0 %v94, 64
  %v325 = vpop.permute.xlu0 %324
  %326 = vrot.lane.b32.xlu0 %v95, 64
  %v327 = vpop.permute.xlu0 %326
  %v336 = vmul.f32 %v302, %v313
  %v337 = vmul.f32 %v302, %v315
  %v338 = vmul.f32 %v302, %v317
  %v339 = vmul.f32 %v302, %v319
  %v340 = vmul.f32 %v303, %v321
  %v341 = vmul.f32 %v303, %v323
  %v342 = vmul.f32 %v303, %v325
  %v343 = vmul.f32 %v303, %v327
  %v345 = vrot.slane %v297, 4
  %v347 = vsel %vm219, %v297, %v345
  %v348 = vsel %vm219, %v345, %v297
  %v349 = vmul.f32 %v347, %v88
  %v350 = vmul.f32 %v347, %v89
  %v351 = vmul.f32 %v347, %v90
  %v352 = vmul.f32 %v347, %v91
  %v353 = vmul.f32 %v348, %v92
  %v354 = vmul.f32 %v348, %v93
  %v355 = vmul.f32 %v348, %v94
  %v356 = vmul.f32 %v348, %v95
  %365 = vrot.lane.b32.xlu0 %v336, 64
  %v366 = vpop.permute.xlu0 %365
  %367 = vrot.lane.b32.xlu0 %v337, 64
  %v368 = vpop.permute.xlu0 %367
  %369 = vrot.lane.b32.xlu0 %v338, 64
  %v370 = vpop.permute.xlu0 %369
  %371 = vrot.lane.b32.xlu0 %v339, 64
  %v372 = vpop.permute.xlu0 %371
  %373 = vrot.lane.b32.xlu0 %v340, 64
  %v374 = vpop.permute.xlu0 %373
  %375 = vrot.lane.b32.xlu0 %v341, 64
  %v376 = vpop.permute.xlu0 %375
  %377 = vrot.lane.b32.xlu0 %v342, 64
  %v378 = vpop.permute.xlu0 %377
  %379 = vrot.lane.b32.xlu0 %v343, 64
  %v380 = vpop.permute.xlu0 %379
  %v381 = vsel %vm222, %v277, 0
  %v383 = vsel %vm222, %v366, 0
  %v385 = vsel %vm222, %v368, 0
  %v387 = vsel %vm222, %v370, 0
  %v389 = vsel %vm222, %v372, 0
  %v391 = vsel %vm222, %v374, 0
  %v393 = vsel %vm222, %v376, 0
  %v395 = vsel %vm222, %v378, 0
  %v397 = vsel %vm222, %v380, 0
  %399 = vmatpush.xpose.msra.mxu0 0.0
  %400 = vmatpush.xpose.msra.mxu0 0.0
  %401 = vmatpush.xpose.msra.mxu0 0.0
  %402 = vmatpush.xpose.msra.mxu0 0.0
  %403 = vmatpush.xpose.msra.mxu0 0.0
  %404 = vmatpush.xpose.msra.mxu0 0.0
  %405 = vmatpush.xpose.msra.mxu0 0.0
  %406 = vmatpush.xpose.msra.mxu0 0.0
  %407 = vmatpush.xpose.msra.mxu0 %v397
  %408 = vmatpush.xpose.msra.mxu0 %v395
  %409 = vmatpush.xpose.msra.mxu0 %v393
  %410 = vmatpush.xpose.msra.mxu0 %v391
  %411 = vmatpush.xpose.msra.mxu0 %v389
  %412 = vmatpush.xpose.msra.mxu0 %v387
  %413 = vmatpush.xpose.msra.mxu0 %v385
  %414 = vmatpush.xpose.msra.mxu0 %v383
  %415 = vmatmul.f32.gmra.mxu0 %v381
  %v416 = vpop.f32.mrf.mxu0
  %v417 = vadd.f32 0.0, %v416
  %418 = vdwg.mxu0
  %v419 = vmul.f32 %v417, 0.35355338
  %v420 = vadd.f32 %v419, %v101
  %v421 = vsel %vm222, %v420, -inf
  %422 = vmax.xlane.f32.xlu0 %v421
  %v423 = vpop.xlane.xlu0 %422
  %v424 = vsub.f32 %v420, %v423
  %v425 = vmul.f32 %v424, 1.442695
  %v426 = vpow.pop %v425
  %v428 = vsel %vm222, %v426, 0
  %430 = vmatpush.msra.mxu0 0.0
  %431 = vmatpush.msra.mxu0 0.0
  %432 = vmatpush.msra.mxu0 0.0
  %433 = vmatpush.msra.mxu0 0.0
  %434 = vmatpush.msra.mxu0 0.0
  %435 = vmatpush.msra.mxu0 0.0
  %436 = vmatpush.msra.mxu0 0.0
  %437 = vmatpush.msra.mxu0 0.0
  %438 = vmatpush.msra.mxu0 %v125
  %439 = vmatpush.msra.mxu0 %v124
  %440 = vmatpush.msra.mxu0 %v123
  %441 = vmatpush.msra.mxu0 %v122
  %442 = vmatpush.msra.mxu0 %v121
  %443 = vmatpush.msra.mxu0 %v120
  %444 = vmatpush.msra.mxu0 %v119
  %445 = vmatpush.msra.mxu0 %v118
  %446 = vmatmul.f32.gmra.mxu0 %v428
  %v447 = vpop.f32.mrf.mxu0
  %v448 = vadd.f32 %v102, %v447
  %449 = vdwg.mxu0
  %v450 = vrcp.pop %v448
  %v451 = vmul.f32 %v426, %v450
  %v453 = vsel %vm222, %v451, 0
  %455 = vmatpush.msra.mxu0 0.0
  %456 = vmatpush.msra.mxu0 0.0
  %457 = vmatpush.msra.mxu0 0.0
  %458 = vmatpush.msra.mxu0 0.0
  %459 = vmatpush.msra.mxu0 0.0
  %460 = vmatpush.msra.mxu0 0.0
  %461 = vmatpush.msra.mxu0 0.0
  %462 = vmatpush.msra.mxu0 0.0
  %463 = vmatpush.msra.mxu0 %v356
  %464 = vmatpush.msra.mxu0 %v355
  %465 = vmatpush.msra.mxu0 %v354
  %466 = vmatpush.msra.mxu0 %v353
  %467 = vmatpush.msra.mxu0 %v352
  %468 = vmatpush.msra.mxu0 %v351
  %469 = vmatpush.msra.mxu0 %v350
  %470 = vmatpush.msra.mxu0 %v349
  %471 = vmatmul.f32.gmra.mxu0 %v453
  %v472 = vpop.f32.mrf.mxu0
  %v473 = vadd.f32 0.0, %v472
  %474 = vdwg.mxu0
  %v476 = vsel %vm222, %v473, 0
  %478 = vmatpush.msra.mxu0 0.0
  %479 = vmatpush.msra.mxu0 0.0
  %480 = vmatpush.msra.mxu0 0.0
  %481 = vmatpush.msra.mxu0 0.0
  %482 = vmatpush.msra.mxu0 0.0
  %483 = vmatpush.msra.mxu0 0.0
  %484 = vmatpush.msra.mxu0 0.0
  %485 = vmatpush.msra.mxu0 0.0
  %486 = vmatpush.msra.mxu0 %v194
  %487 = vmatpush.msra.mxu0 %v193
  %488 = vmatpush.msra.mxu0 %v192
  %489 = vmatpush.msra.mxu0 %v191
  %490 = vmatpush.msra.mxu0 %v190
  %491 = vmatpush.msra.mxu0 %v189
  %492 = vmatpush.msra.mxu0 %v188
  %493 = vmatpush.msra.mxu0 %v187
  %494 = vmatmul.f32.gmra.mxu0 %v476
  %v495 = vpop.f32.mrf.mxu0
  %v496 = vadd.f32 0.0, %v495
  %497 = vdwg.mxu0
  %v498 = vadd.f32 %v163, %v496
  %v499 = vperm.slane %v166, 0
  %v500 = vadd.f32 %v498, %v499
  %v501 = vsel %vm222, %v500, 0.0
  %502 = vadd.xlane.f32.xlu0 %v501
  %v503 = vpop.xlane.xlu0 %502
  %v504 = vmul.f32 %v503, %v232
  %v505 = vsub.f32 %v500, %v504
  %v506 = vmul.f32 %v505, %v505
  %v507 = vsel %vm222, %v506, 0.0
  %508 = vadd.xlane.f32.xlu0 %v507
  %v509 = vpop.xlane.xlu0 %508
  %v510 = vmul.f32 %v509, %v232
  %v511 = vadd.f32 %v510, 1e-05
  %v512 = vrsqrt.pop %v511
  %v513 = vmul.f32 %v512, %v511
  %v514 = vmul.f32 %v513, %v512
  %v515 = vmul.f32 0.5, %v514
  %v516 = vsub.f32 1.5, %v515
  %v517 = vmul.f32 %v512, %v516
  %vm518 = vweird.f32 %v511
  %vm519 = vweird.f32 %v512
  %vm520 = vmor %vm518, %vm519
  %v521 = vsel %vm520, %v512, %v517
  %v522 = vmul.f32 %v505, %v521
  %v523 = vperm.slane %v167, 0
  %v524 = vmul.f32 %v522, %v523
  %v525 = vperm.slane %v168, 0
  %v526 = vadd.f32 %v524, %v525
  %v527 = vperm.slane %v169, 0
  %v529 = vsel %vm222, %v526, 0
  %531 = vmatpush.msra.mxu0 0.0
  %532 = vmatpush.msra.mxu0 0.0
  %533 = vmatpush.msra.mxu0 0.0
  %534 = vmatpush.msra.mxu0 0.0
  %535 = vmatpush.msra.mxu0 0.0
  %536 = vmatpush.msra.mxu0 0.0
  %537 = vmatpush.msra.mxu0 0.0
  %538 = vmatpush.msra.mxu0 0.0
  %539 = vmatpush.msra.mxu0 %v202
  %540 = vmatpush.msra.mxu0 %v201
  %541 = vmatpush.msra.mxu0 %v200
  %542 = vmatpush.msra.mxu0 %v199
  %543 = vmatpush.msra.mxu0 %v198
  %544 = vmatpush.msra.mxu0 %v197
  %545 = vmatpush.msra.mxu0 %v196
  %546 = vmatpush.msra.mxu0 %v195
  %547 = vmatmul.f32.gmra.mxu0 %v529
  %v548 = vpop.f32.mrf.mxu0
  %v549 = vadd.f32 %v527, %v548
  %550 = vdwg.mxu0
  %v551 = vmax.f32 %v549, 0.0
  %v553 = vsel %vm222, %v551, 0
  %555 = vmatpush.msra.mxu0 0.0
  %556 = vmatpush.msra.mxu0 0.0
  %557 = vmatpush.msra.mxu0 0.0
  %558 = vmatpush.msra.mxu0 0.0
  %559 = vmatpush.msra.mxu0 0.0
  %560 = vmatpush.msra.mxu0 0.0
  %561 = vmatpush.msra.mxu0 0.0
  %562 = vmatpush.msra.mxu0 0.0
  %563 = vmatpush.msra.mxu0 %v210
  %564 = vmatpush.msra.mxu0 %v209
  %565 = vmatpush.msra.mxu0 %v208
  %566 = vmatpush.msra.mxu0 %v207
  %567 = vmatpush.msra.mxu0 %v206
  %568 = vmatpush.msra.mxu0 %v205
  %569 = vmatpush.msra.mxu0 %v204
  %570 = vmatpush.msra.mxu0 %v203
  %571 = vmatmul.f32.gmra.mxu0 %v553
  %v572 = vpop.f32.mrf.mxu0
  %v573 = vadd.f32 0.0, %v572
  %574 = vdwg.mxu0
  %v575 = vadd.f32 %v500, %v573
  %v576 = vperm.slane %v170, 0
  %v577 = vadd.f32 %v575, %v576
  %v578 = vld [vmem:[%s4 + $0x7] sm:$0x1]
  %v579 = vld [vmem:[%s4 + $0x8] sm:$0x1]
  %v580 = vld [vmem:[%s4 + $0x9] sm:$0x1]
  %v581 = vld [vmem:[%s4 + $0xa] sm:$0x1]
  %v582 = vld [vmem:[%s4 + $0xb] sm:$0x1]
  %v583 = vld [vmem:[%s4 + $0xc] sm:$0x1]
  %v584 = vld [vmem:[%s4 + $0xd] sm:$0x1]
  %v585 = vld [vmem:[%s1 + $0x80] sm:$0xff]
  %v586 = vld [vmem:[%s1 + $0x88] sm:$0xff]
  %v587 = vld [vmem:[%s1 + $0x90] sm:$0xff]
  %v588 = vld [vmem:[%s1 + $0x98] sm:$0xff]
  %v589 = vld [vmem:[%s1 + $0xa0] sm:$0xff]
  %v590 = vld [vmem:[%s1 + $0xa8] sm:$0xff]
  %v591 = vld [vmem:[%s1 + $0xb0] sm:$0xff]
  %v592 = vld [vmem:[%s1 + $0xb8] sm:$0xff]
  %v593 = vld [vmem:[%s1 + $0xc0] sm:$0xff]
  %v594 = vld [vmem:[%s1 + $0xc8] sm:$0xff]
  %v595 = vld [vmem:[%s1 + $0xd0] sm:$0xff]
  %v596 = vld [vmem:[%s1 + $0xd8] sm:$0xff]
  %v597 = vld [vmem:[%s1 + $0xe0] sm:$0xff]
  %v598 = vld [vmem:[%s1 + $0xe8] sm:$0xff]
  %v599 = vld [vmem:[%s1 + $0xf0] sm:$0xff]
  %v600 = vld [vmem:[%s1 + $0xf8] sm:$0xff]
  %v601 = vld [vmem:[%s2 + $0xc0] sm:$0xff]
  %v602 = vld [vmem:[%s2 + $0xc8] sm:$0xff]
  %v603 = vld [vmem:[%s2 + $0xd0] sm:$0xff]
  %v604 = vld [vmem:[%s2 + $0xd8] sm:$0xff]
  %v605 = vld [vmem:[%s2 + $0xe0] sm:$0xff]
  %v606 = vld [vmem:[%s2 + $0xe8] sm:$0xff]
  %v607 = vld [vmem:[%s2 + $0xf0] sm:$0xff]
  %v608 = vld [vmem:[%s2 + $0xf8] sm:$0xff]
  %v609 = vld [vmem:[%s2 + $0x100] sm:$0xff]
  %v610 = vld [vmem:[%s2 + $0x108] sm:$0xff]
  %v611 = vld [vmem:[%s2 + $0x110] sm:$0xff]
  %v612 = vld [vmem:[%s2 + $0x118] sm:$0xff]
  %v613 = vld [vmem:[%s2 + $0x120] sm:$0xff]
  %v614 = vld [vmem:[%s2 + $0x128] sm:$0xff]
  %v615 = vld [vmem:[%s2 + $0x130] sm:$0xff]
  %v616 = vld [vmem:[%s2 + $0x138] sm:$0xff]
  %v617 = vld [vmem:[%s2 + $0x140] sm:$0xff]
  %v618 = vld [vmem:[%s2 + $0x148] sm:$0xff]
  %v619 = vld [vmem:[%s2 + $0x150] sm:$0xff]
  %v620 = vld [vmem:[%s2 + $0x158] sm:$0xff]
  %v621 = vld [vmem:[%s2 + $0x160] sm:$0xff]
  %v622 = vld [vmem:[%s2 + $0x168] sm:$0xff]
  %v623 = vld [vmem:[%s2 + $0x170] sm:$0xff]
  %v624 = vld [vmem:[%s2 + $0x178] sm:$0xff]
  %v625 = vld [vmem:[%s3] sm:$0xf0]
  %v626 = vld [vmem:[%s3 + $0x8] sm:$0xf0]
  %v629 = vrot.slane %v625, 4
  %v630 = vrot.slane %v626, 4
  %v633 = vsel %vm219, %v629, %v625
  %v634 = vsel %vm219, %v630, %v626
  %v635 = vsel %vm222, %v577, 0.0
  %636 = vadd.xlane.f32.xlu0 %v635
  %v637 = vpop.xlane.xlu0 %636
  %v638 = vmul.f32 %v637, %v232
  %v639 = vsub.f32 %v577, %v638
  %v640 = vmul.f32 %v639, %v639
  %v641 = vsel %vm222, %v640, 0.0
  %642 = vadd.xlane.f32.xlu0 %v641
  %v643 = vpop.xlane.xlu0 %642
  %v644 = vmul.f32 %v643, %v232
  %v645 = vadd.f32 %v644, 1e-05
  %v646 = vrsqrt.pop %v645
  %v647 = vmul.f32 %v646, %v645
  %v648 = vmul.f32 %v647, %v646
  %v649 = vmul.f32 0.5, %v648
  %v650 = vsub.f32 1.5, %v649
  %v651 = vmul.f32 %v646, %v650
  %vm652 = vweird.f32 %v645
  %vm653 = vweird.f32 %v646
  %vm654 = vmor %vm652, %vm653
  %v655 = vsel %vm654, %v646, %v651
  %v656 = vmul.f32 %v639, %v655
  %v657 = vperm.slane %v578, 0
  %v658 = vmul.f32 %v656, %v657
  %v659 = vperm.slane %v579, 0
  %v660 = vadd.f32 %v658, %v659
  %v662 = vsel %vm222, %v660, 0
  %664 = vmatpush.msra.mxu0 0.0
  %665 = vmatpush.msra.mxu0 0.0
  %666 = vmatpush.msra.mxu0 0.0
  %667 = vmatpush.msra.mxu0 0.0
  %668 = vmatpush.msra.mxu0 0.0
  %669 = vmatpush.msra.mxu0 0.0
  %670 = vmatpush.msra.mxu0 0.0
  %671 = vmatpush.msra.mxu0 0.0
  %672 = vmatpush.msra.mxu0 %v599
  %673 = vmatpush.msra.mxu0 %v597
  %674 = vmatpush.msra.mxu0 %v595
  %675 = vmatpush.msra.mxu0 %v593
  %676 = vmatpush.msra.mxu0 %v591
  %677 = vmatpush.msra.mxu0 %v589
  %678 = vmatpush.msra.mxu0 %v587
  %679 = vmatpush.msra.mxu0 %v585
  %680 = vmatmul.f32.gmra.mxu0 %v662
  %v681 = vpop.f32.mrf.mxu0
  %v682 = vadd.f32 %v633, %v681
  %683 = vdwg.mxu0
  %684 = vmatpush.msra.mxu0 0.0
  %685 = vmatpush.msra.mxu0 0.0
  %686 = vmatpush.msra.mxu0 0.0
  %687 = vmatpush.msra.mxu0 0.0
  %688 = vmatpush.msra.mxu0 0.0
  %689 = vmatpush.msra.mxu0 0.0
  %690 = vmatpush.msra.mxu0 0.0
  %691 = vmatpush.msra.mxu0 0.0
  %692 = vmatpush.msra.mxu0 %v600
  %693 = vmatpush.msra.mxu0 %v598
  %694 = vmatpush.msra.mxu0 %v596
  %695 = vmatpush.msra.mxu0 %v594
  %696 = vmatpush.msra.mxu0 %v592
  %697 = vmatpush.msra.mxu0 %v590
  %698 = vmatpush.msra.mxu0 %v588
  %699 = vmatpush.msra.mxu0 %v586
  %700 = vmatmul.f32.gmra.mxu0 %v662
  %v701 = vpop.f32.mrf.mxu0
  %v702 = vadd.f32 %v634, %v701
  %703 = vdwg.mxu0
  %v705 = vrot.slane %v682, 4
  %v707 = vsel %vm219, %v682, %v705
  %v708 = vsel %vm219, %v705, %v682
  %v709 = vmul.f32 %v707, %v313
  %v710 = vmul.f32 %v707, %v315
  %v711 = vmul.f32 %v707, %v317
  %v712 = vmul.f32 %v707, %v319
  %v713 = vmul.f32 %v708, %v321
  %v714 = vmul.f32 %v708, %v323
  %v715 = vmul.f32 %v708, %v325
  %v716 = vmul.f32 %v708, %v327
  %v718 = vrot.slane %v702, 4
  %v720 = vsel %vm219, %v702, %v718
  %v721 = vsel %vm219, %v718, %v702
  %v722 = vmul.f32 %v720, %v88
  %v723 = vmul.f32 %v720, %v89
  %v724 = vmul.f32 %v720, %v90
  %v725 = vmul.f32 %v720, %v91
  %v726 = vmul.f32 %v721, %v92
  %v727 = vmul.f32 %v721, %v93
  %v728 = vmul.f32 %v721, %v94
  %v729 = vmul.f32 %v721, %v95
  %738 = vrot.lane.b32.xlu0 %v709, 64
  %v739 = vpop.permute.xlu0 %738
  %740 = vrot.lane.b32.xlu0 %v710, 64
  %v741 = vpop.permute.xlu0 %740
  %742 = vrot.lane.b32.xlu0 %v711, 64
  %v743 = vpop.permute.xlu0 %742
  %744 = vrot.lane.b32.xlu0 %v712, 64
  %v745 = vpop.permute.xlu0 %744
  %746 = vrot.lane.b32.xlu0 %v713, 64
  %v747 = vpop.permute.xlu0 %746
  %748 = vrot.lane.b32.xlu0 %v714, 64
  %v749 = vpop.permute.xlu0 %748
  %750 = vrot.lane.b32.xlu0 %v715, 64
  %v751 = vpop.permute.xlu0 %750
  %752 = vrot.lane.b32.xlu0 %v716, 64
  %v753 = vpop.permute.xlu0 %752
  %v754 = vsel %vm222, %v682, 0
  %v756 = vsel %vm222, %v739, 0
  %v758 = vsel %vm222, %v741, 0
  %v760 = vsel %vm222, %v743, 0
  %v762 = vsel %vm222, %v745, 0
  %v764 = vsel %vm222, %v747, 0
  %v766 = vsel %vm222, %v749, 0
  %v768 = vsel %vm222, %v751, 0
  %v770 = vsel %vm222, %v753, 0
  %772 = vmatpush.xpose.msra.mxu0 0.0
  %773 = vmatpush.xpose.msra.mxu0 0.0
  %774 = vmatpush.xpose.msra.mxu0 0.0
  %775 = vmatpush.xpose.msra.mxu0 0.0
  %776 = vmatpush.xpose.msra.mxu0 0.0
  %777 = vmatpush.xpose.msra.mxu0 0.0
  %778 = vmatpush.xpose.msra.mxu0 0.0
  %779 = vmatpush.xpose.msra.mxu0 0.0
  %780 = vmatpush.xpose.msra.mxu0 %v770
  %781 = vmatpush.xpose.msra.mxu0 %v768
  %782 = vmatpush.xpose.msra.mxu0 %v766
  %783 = vmatpush.xpose.msra.mxu0 %v764
  %784 = vmatpush.xpose.msra.mxu0 %v762
  %785 = vmatpush.xpose.msra.mxu0 %v760
  %786 = vmatpush.xpose.msra.mxu0 %v758
  %787 = vmatpush.xpose.msra.mxu0 %v756
  %788 = vmatmul.f32.gmra.mxu0 %v754
  %v789 = vpop.f32.mrf.mxu0
  %v790 = vadd.f32 0.0, %v789
  %791 = vdwg.mxu0
  %v792 = vmul.f32 %v790, 0.35355338
  %v793 = vadd.f32 %v792, %v101
  %v794 = vsel %vm222, %v793, -inf
  %795 = vmax.xlane.f32.xlu0 %v794
  %v796 = vpop.xlane.xlu0 %795
  %v797 = vsub.f32 %v793, %v796
  %v798 = vmul.f32 %v797, 1.442695
  %v799 = vpow.pop %v798
  %v801 = vsel %vm222, %v799, 0
  %803 = vmatpush.msra.mxu0 0.0
  %804 = vmatpush.msra.mxu0 0.0
  %805 = vmatpush.msra.mxu0 0.0
  %806 = vmatpush.msra.mxu0 0.0
  %807 = vmatpush.msra.mxu0 0.0
  %808 = vmatpush.msra.mxu0 0.0
  %809 = vmatpush.msra.mxu0 0.0
  %810 = vmatpush.msra.mxu0 0.0
  %811 = vmatpush.msra.mxu0 %v125
  %812 = vmatpush.msra.mxu0 %v124
  %813 = vmatpush.msra.mxu0 %v123
  %814 = vmatpush.msra.mxu0 %v122
  %815 = vmatpush.msra.mxu0 %v121
  %816 = vmatpush.msra.mxu0 %v120
  %817 = vmatpush.msra.mxu0 %v119
  %818 = vmatpush.msra.mxu0 %v118
  %819 = vmatmul.f32.gmra.mxu0 %v801
  %v820 = vpop.f32.mrf.mxu0
  %v821 = vadd.f32 %v102, %v820
  %822 = vdwg.mxu0
  %v823 = vrcp.pop %v821
  %v824 = vmul.f32 %v799, %v823
  %v826 = vsel %vm222, %v824, 0
  %828 = vmatpush.msra.mxu0 0.0
  %829 = vmatpush.msra.mxu0 0.0
  %830 = vmatpush.msra.mxu0 0.0
  %831 = vmatpush.msra.mxu0 0.0
  %832 = vmatpush.msra.mxu0 0.0
  %833 = vmatpush.msra.mxu0 0.0
  %834 = vmatpush.msra.mxu0 0.0
  %835 = vmatpush.msra.mxu0 0.0
  %836 = vmatpush.msra.mxu0 %v729
  %837 = vmatpush.msra.mxu0 %v728
  %838 = vmatpush.msra.mxu0 %v727
  %839 = vmatpush.msra.mxu0 %v726
  %840 = vmatpush.msra.mxu0 %v725
  %841 = vmatpush.msra.mxu0 %v724
  %842 = vmatpush.msra.mxu0 %v723
  %843 = vmatpush.msra.mxu0 %v722
  %844 = vmatmul.f32.gmra.mxu0 %v826
  %v845 = vpop.f32.mrf.mxu0
  %v846 = vadd.f32 0.0, %v845
  %847 = vdwg.mxu0
  %v849 = vsel %vm222, %v846, 0
  %851 = vmatpush.msra.mxu0 0.0
  %852 = vmatpush.msra.mxu0 0.0
  %853 = vmatpush.msra.mxu0 0.0
  %854 = vmatpush.msra.mxu0 0.0
  %855 = vmatpush.msra.mxu0 0.0
  %856 = vmatpush.msra.mxu0 0.0
  %857 = vmatpush.msra.mxu0 0.0
  %858 = vmatpush.msra.mxu0 0.0
  %859 = vmatpush.msra.mxu0 %v608
  %860 = vmatpush.msra.mxu0 %v607
  %861 = vmatpush.msra.mxu0 %v606
  %862 = vmatpush.msra.mxu0 %v605
  %863 = vmatpush.msra.mxu0 %v604
  %864 = vmatpush.msra.mxu0 %v603
  %865 = vmatpush.msra.mxu0 %v602
  %866 = vmatpush.msra.mxu0 %v601
  %867 = vmatmul.f32.gmra.mxu0 %v849
  %v868 = vpop.f32.mrf.mxu0
  %v869 = vadd.f32 0.0, %v868
  %870 = vdwg.mxu0
  %v871 = vadd.f32 %v577, %v869
  %v872 = vperm.slane %v580, 0
  %v873 = vadd.f32 %v871, %v872
  %v874 = vsel %vm222, %v873, 0.0
  %875 = vadd.xlane.f32.xlu0 %v874
  %v876 = vpop.xlane.xlu0 %875
  %v877 = vmul.f32 %v876, %v232
  %v878 = vsub.f32 %v873, %v877
  %v879 = vmul.f32 %v878, %v878
  %v880 = vsel %vm222, %v879, 0.0
  %881 = vadd.xlane.f32.xlu0 %v880
  %v882 = vpop.xlane.xlu0 %881
  %v883 = vmul.f32 %v882, %v232
  %v884 = vadd.f32 %v883, 1e-05
  %v885 = vrsqrt.pop %v884
  %v886 = vmul.f32 %v885, %v884
  %v887 = vmul.f32 %v886, %v885
  %v888 = vmul.f32 0.5, %v887
  %v889 = vsub.f32 1.5, %v888
  %v890 = vmul.f32 %v885, %v889
  %vm891 = vweird.f32 %v884
  %vm892 = vweird.f32 %v885
  %vm893 = vmor %vm891, %vm892
  %v894 = vsel %vm893, %v885, %v890
  %v895 = vmul.f32 %v878, %v894
  %v896 = vperm.slane %v581, 0
  %v897 = vmul.f32 %v895, %v896
  %v898 = vperm.slane %v582, 0
  %v899 = vadd.f32 %v897, %v898
  %v900 = vperm.slane %v583, 0
  %v902 = vsel %vm222, %v899, 0
  %904 = vmatpush.msra.mxu0 0.0
  %905 = vmatpush.msra.mxu0 0.0
  %906 = vmatpush.msra.mxu0 0.0
  %907 = vmatpush.msra.mxu0 0.0
  %908 = vmatpush.msra.mxu0 0.0
  %909 = vmatpush.msra.mxu0 0.0
  %910 = vmatpush.msra.mxu0 0.0
  %911 = vmatpush.msra.mxu0 0.0
  %912 = vmatpush.msra.mxu0 %v616
  %913 = vmatpush.msra.mxu0 %v615
  %914 = vmatpush.msra.mxu0 %v614
  %915 = vmatpush.msra.mxu0 %v613
  %916 = vmatpush.msra.mxu0 %v612
  %917 = vmatpush.msra.mxu0 %v611
  %918 = vmatpush.msra.mxu0 %v610
  %919 = vmatpush.msra.mxu0 %v609
  %920 = vmatmul.f32.gmra.mxu0 %v902
  %v921 = vpop.f32.mrf.mxu0
  %v922 = vadd.f32 %v900, %v921
  %923 = vdwg.mxu0
  %v924 = vmax.f32 %v922, 0.0
  %v926 = vsel %vm222, %v924, 0
  %928 = vmatpush.msra.mxu0 0.0
  %929 = vmatpush.msra.mxu0 0.0
  %930 = vmatpush.msra.mxu0 0.0
  %931 = vmatpush.msra.mxu0 0.0
  %932 = vmatpush.msra.mxu0 0.0
  %933 = vmatpush.msra.mxu0 0.0
  %934 = vmatpush.msra.mxu0 0.0
  %935 = vmatpush.msra.mxu0 0.0
  %936 = vmatpush.msra.mxu0 %v624
  %937 = vmatpush.msra.mxu0 %v623
  %938 = vmatpush.msra.mxu0 %v622
  %939 = vmatpush.msra.mxu0 %v621
  %940 = vmatpush.msra.mxu0 %v620
  %941 = vmatpush.msra.mxu0 %v619
  %942 = vmatpush.msra.mxu0 %v618
  %943 = vmatpush.msra.mxu0 %v617
  %944 = vmatmul.f32.gmra.mxu0 %v926
  %v945 = vpop.f32.mrf.mxu0
  %v946 = vadd.f32 0.0, %v945
  %947 = vdwg.mxu0
  %v948 = vadd.f32 %v873, %v946
  %v949 = vperm.slane %v584, 0
  %v950 = vadd.f32 %v948, %v949
  %v951 = vld [vmem:[%s4 + $0xe] sm:$0x1]
  %v952 = vld [vmem:[%s4 + $0xf] sm:$0x1]
  %v953 = vsel %vm222, %v950, 0.0
  %954 = vadd.xlane.f32.xlu0 %v953
  %v955 = vpop.xlane.xlu0 %954
  %v956 = vmul.f32 %v955, %v232
  %v957 = vsub.f32 %v950, %v956
  %v958 = vmul.f32 %v957, %v957
  %v959 = vsel %vm222, %v958, 0.0
  %960 = vadd.xlane.f32.xlu0 %v959
  %v961 = vpop.xlane.xlu0 %960
  %v962 = vmul.f32 %v961, %v232
  %v963 = vadd.f32 %v962, 1e-05
  %v964 = vrsqrt.pop %v963
  %v965 = vmul.f32 %v964, %v963
  %v966 = vmul.f32 %v965, %v964
  %v967 = vmul.f32 0.5, %v966
  %v968 = vsub.f32 1.5, %v967
  %v969 = vmul.f32 %v964, %v968
  %vm970 = vweird.f32 %v963
  %vm971 = vweird.f32 %v964
  %vm972 = vmor %vm970, %vm971
  %v973 = vsel %vm972, %v964, %v969
  %v974 = vmul.f32 %v957, %v973
  %v975 = vperm.slane %v951, 0
  %v976 = vmul.f32 %v974, %v975
  %v977 = vperm.slane %v952, 0
  %v978 = vadd.f32 %v976, %v977
  %v979 = vxor.u32 %v978, 2147483648
  %v980 = vmul.f32 %v979, 1.442695
  %v981 = vpow.pop %v980
  %v982 = vadd.f32 %v981, 1.0
  %v983 = vrcp.pop %v982
  %v984 = vmul.f32 %v982, %v983
  %v985 = vsub.f32 1.0, %v984
  %v986 = vmul.f32 %v983, %v985
  %v987 = vadd.f32 %v983, %v986
  %vm988 = vweird.f32 %v982
  %vm989 = vweird.f32 %v983
  %vm990 = vmor %vm988, %vm989
  %v991 = vsel %vm990, %v983, %v987
  %v992 = vand.u32 2147483647, %v982
  %vm993 = vcmp.eq.f32.partialorder %v992, 8.507059e+37
  %v994 = vand.u32 %v982, 2147483648
  %v995 = vor.u32 1.1754944e-38, %v994
  %v996 = vsel %vm993, %v995, %v991
  %v997 = vmul.f32 1.0, %v996
  %v998 = vmul.f32 %v997, %v126
  %1000 = vrot.lane.b32.xlu0 %v978, 64
  %v1001 = vpop.permute.xlu0 %1000
  %v1003 = vsel %vm222, %v998, %v1001
  %1004 = vst [vmem:[%s5] sm:$0xff] %v1003
  // Predicated region
  $region22: #{compress_model_forward.1} parent=0 // pred_check
    _
  $region23: #{compress_model_forward.1} parent=0 // pred_check_branch
    %1006 = sbr.rel (0) target = $region25
  $region24: #{compress_model_forward.1} parent=0 // pred_region
    _
  $region25: #{compress_model_forward.1} parent=0 // pred_fallthru
    _
  // Predicated region
  $region26: #{compress_model_forward.1} parent=0 // pred_check
    _
  $region27: #{compress_model_forward.1} parent=0 // pred_check_branch
    %1008 = sbr.rel (0) target = $region29
  $region28: #{compress_model_forward.1} parent=0 // pred_region
    _
  $region29: #{compress_model_forward.1} parent=0 // pred_fallthru
    _

</llo_original>
